<compile_context>
chip_gen: v5e
topology: v5e:2x2
jax: 0.10.0
libtpu: 0.0.40
codegen_flags: <defaults>
</compile_context>

<pallas_src>
import jax
import jax.numpy as jnp
from jax.experimental import pallas as pl
from jax.experimental.pallas import tpu as pltpu


def ffn_kernel(x_ref, w1_ref, b1_ref, w2_ref, b2_ref, o_ref, acc_ref):
    j = pl.program_id(1)  # d_ff tile index (reduction axis of the 2nd matmul)

    @pl.when(j == 0)
    def _():
        # Initialize the accumulator with the fc2 bias (broadcast over rows);
        # saves a separate add in the epilogue.
        acc_ref[...] = jnp.broadcast_to(b2_ref[...], acc_ref.shape)

    # fc1 slice: [tm, d_model] @ [d_model, tff] -> f32; bias + ReLU in f32.
    h = jnp.dot(x_ref[...], w1_ref[...], preferred_element_type=jnp.float32)
    h = jnp.maximum(h + b1_ref[...], 0.0)

    # fc2 partial product over this d_ff tile, accumulated in f32 VMEM scratch.
    acc_ref[...] += jnp.dot(h.astype(w2_ref.dtype), w2_ref[...],
                            preferred_element_type=jnp.float32)

    @pl.when(j == pl.num_programs(1) - 1)
    def _():
        o_ref[...] = acc_ref[...].astype(o_ref.dtype)


def _round_up(n, m):
    return ((n + m - 1) // m) * m


def feed_forward(x, w1, b1, w2, b2, *, tm=256, tff=512, out_dtype=jnp.float32):
    """x: [M, d_model]; w1: [d_model, d_ff]; b1: [1, d_ff];
    w2: [d_ff, d_model]; b2: [1, d_model] -> [M, d_model] (out_dtype)."""
    M, d_model = x.shape
    d_ff = w1.shape[1]

    assert d_model % 128 == 0, "d_model must be a multiple of 128 (lane axis)"

    # bf16 operands for the MXU, f32 biases.
    cx = x.astype(jnp.bfloat16)
    cw1 = w1.astype(jnp.bfloat16)
    cw2 = w2.astype(jnp.bfloat16)
    cb1 = b1.astype(jnp.float32)
    cb2 = b2.astype(jnp.float32)

    # Clamp tiles to the problem while keeping (8, 128) alignment.
    tm = min(tm, _round_up(M, 8))
    tff = min(tff, d_ff)
    assert d_ff % tff == 0, "d_ff must tile evenly by tff"
    assert tff % 128 == 0, "tff must be a multiple of 128"

    M_pad = _round_up(M, tm)
    if M_pad != M:
        cx = jnp.pad(cx, ((0, M_pad - M), (0, 0)))

    grid = (M_pad // tm, d_ff // tff)

    # Advisory cost estimate for the XLA scheduler.
    flops = 2 * M_pad * (d_model * d_ff + d_ff * d_model)
    bytes_accessed = (cx.size * 2 + cw1.size * 2 + cw2.size * 2
                      + cb1.size * 4 + cb2.size * 4 + M_pad * d_model * 4)

    # Double-buffered tiles + f32 accumulator, with 2x headroom; stay well
    # under v7x's 64 MiB physical VMEM (and v5e/v6e 128 MiB).
    vmem_needed = (
        2 * tm * d_model * 2            # x tile (bf16), double-buffered
        + 2 * d_model * tff * 2         # w1 tile (bf16), double-buffered
        + 2 * tff * d_model * 2         # w2 tile (bf16), double-buffered
        + 2 * (tff + d_model) * 4       # biases (f32), double-buffered
        + 2 * tm * d_model * 4          # out tile (f32), double-buffered
        + tm * d_model * 4              # f32 accumulator scratch
    )
    vmem_limit = min(max(2 * vmem_needed, 32 * 1024 * 1024), 60 * 1024 * 1024)

    out = pl.pallas_call(
        ffn_kernel,
        out_shape=jax.ShapeDtypeStruct((M_pad, d_model), out_dtype),
        grid_spec=pltpu.PrefetchScalarGridSpec(
            num_scalar_prefetch=0,
            grid=grid,
            in_specs=[
                pl.BlockSpec((tm, d_model), lambda i, j: (i, 0)),    # x rows
                pl.BlockSpec((d_model, tff), lambda i, j: (0, j)),   # w1 col slab
                pl.BlockSpec((1, tff), lambda i, j: (0, j)),         # b1 slab
                pl.BlockSpec((tff, d_model), lambda i, j: (j, 0)),   # w2 row slab
                pl.BlockSpec((1, d_model), lambda i, j: (0, 0)),     # b2
            ],
            out_specs=pl.BlockSpec((tm, d_model), lambda i, j: (i, 0)),
            scratch_shapes=[pltpu.VMEM((tm, d_model), jnp.float32)],
        ),
        compiler_params=pltpu.CompilerParams(
            dimension_semantics=("parallel", "arbitrary"),
            vmem_limit_bytes=vmem_limit,
        ),
        cost_estimate=pl.CostEstimate(
            flops=flops, transcendentals=0, bytes_accessed=bytes_accessed),
    )(cx, cw1, cb1, cw2, cb2)

    return out[:M] if M_pad != M else out


if __name__ == "__main__":
    # Module defaults: d_model=512, d_ff=2048; small token count.
    batch, seq = 2, 8
    d_model, d_ff = 512, 2048

    key = jax.random.PRNGKey(0)
    kx, kw1, kb1, kw2, kb2 = jax.random.split(key, 5)

    x = jax.random.normal(kx, (batch, seq, d_model), dtype=jnp.float32)

    # Deterministic init mimicking torch.nn.Linear: U(-1/sqrt(fan_in), ...).
    bound1 = 1.0 / (d_model ** 0.5)
    bound2 = 1.0 / (d_ff ** 0.5)
    # Stored as [in, out] (transpose of PyTorch's [out, in]).
    w1 = jax.random.uniform(kw1, (d_model, d_ff), jnp.float32, -bound1, bound1)
    b1 = jax.random.uniform(kb1, (1, d_ff), jnp.float32, -bound1, bound1)
    w2 = jax.random.uniform(kw2, (d_ff, d_model), jnp.float32, -bound2, bound2)
    b2 = jax.random.uniform(kb2, (1, d_model), jnp.float32, -bound2, bound2)

    # Flatten tokens to rows for the kernel, restore shape after.
    x2d = x.reshape(batch * seq, d_model)
    out2d = feed_forward(x2d, w1, b1, w2, b2)
    out = out2d.reshape(batch, seq, d_model)
    jax.block_until_ready(out)

    # Reference with matching bf16-operand / f32-accumulate math.
    xb = x2d.astype(jnp.bfloat16)
    w1b = w1.astype(jnp.bfloat16)
    w2b = w2.astype(jnp.bfloat16)
    h_ref = jnp.maximum(
        jnp.dot(xb, w1b, preferred_element_type=jnp.float32) + b1, 0.0)
    ref2d = jnp.dot(h_ref.astype(jnp.bfloat16), w2b,
                    preferred_element_type=jnp.float32) + b2
    ref = ref2d.reshape(batch, seq, d_model)

    assert jnp.allclose(out, ref, atol=2e-2, rtol=2e-2), "mismatch vs reference"

    print("KERNEL_OK")
</pallas_src>

<mosaic_0001>
module attributes {stable_mosaic.version = 11 : i64} {
  func.func @ffn_kernel(%arg0: i32, %arg1: i32, %arg2: memref<16x512xbf16, #tpu.memory_space<vmem>>, %arg3: memref<512x512xbf16, #tpu.memory_space<vmem>>, %arg4: memref<1x512xf32, #tpu.memory_space<vmem>>, %arg5: memref<512x512xbf16, #tpu.memory_space<vmem>>, %arg6: memref<1x512xf32, #tpu.memory_space<vmem>>, %arg7: memref<16x512xf32, #tpu.memory_space<vmem>>, %arg8: memref<16x512xf32, #tpu.memory_space<vmem>>) attributes {dimension_semantics = [#tpu.dimension_semantics<parallel>, #tpu.dimension_semantics<arbitrary>], iteration_bounds = array<i64: 1, 4>, scalar_prefetch = 0 : i64, scratch_operands = 1 : i64, tpu.core_type = #tpu.core_type<tc>, window_params = [{transform_indices = @transform_0, window_bounds = array<i64: 16, 512>}, {transform_indices = @transform_1, window_bounds = array<i64: 512, 512>}, {transform_indices = @transform_2, window_bounds = array<i64: 1, 512>}, {transform_indices = @transform_3, window_bounds = array<i64: 512, 512>}, {pipeline_mode = #tpu.pipeline_mode<synchronous>, transform_indices = @transform_4, window_bounds = array<i64: 1, 512>}, {transform_indices = @transform_5, window_bounds = array<i64: 16, 512>}]} {
    %c0_i32 = arith.constant 0 : i32
    %0 = arith.cmpi eq, %arg1, %c0_i32 : i32
    %1 = arith.extui %0 : i1 to i32
    %c0_i32_0 = arith.constant 0 : i32
    %2 = arith.cmpi ne, %1, %c0_i32_0 : i32
    scf.if %2 {
      %c0_15 = arith.constant 0 : index
      %c0_16 = arith.constant 0 : index
      %20 = vector.load %arg6[%c0_15, %c0_16] : memref<1x512xf32, #tpu.memory_space<vmem>>, vector<1x512xf32>
      %21 = vector.shape_cast %20 : vector<1x512xf32> to vector<1x512xf32>
      %22 = vector.broadcast %21 : vector<1x512xf32> to vector<16x512xf32>
      %c0_17 = arith.constant 0 : index
      %c0_18 = arith.constant 0 : index
      %23 = vector.load %arg8[%c0_17, %c0_18] : memref<16x512xf32, #tpu.memory_space<vmem>>, vector<16x512xf32>
      tpu.vector_store %arg8[%c0_17, %c0_18], %22 {strides = array<i32>} : memref<16x512xf32, #tpu.memory_space<vmem>>, vector<16x512xf32>,
    } else {
    }
    %c0 = arith.constant 0 : index
    %c0_1 = arith.constant 0 : index
    %3 = vector.load %arg2[%c0, %c0_1] : memref<16x512xbf16, #tpu.memory_space<vmem>>, vector<16x512xbf16>
    %c0_2 = arith.constant 0 : index
    %c0_3 = arith.constant 0 : index
    %4 = vector.load %arg3[%c0_2, %c0_3] : memref<512x512xbf16, #tpu.memory_space<vmem>>, vector<512x512xbf16>
    %cst = arith.constant dense<0.000000e+00> : vector<16x512xf32>
    %5 = tpu.matmul %3, %4, %cst {dimension_numbers = #tpu.dot_dimension_numbers<[1], [0], [0], [1], [0, 0, 1, 1], [], []>} : vector<16x512xbf16>, vector<512x512xbf16>, vector<16x512xf32> -> vector<16x512xf32>
    %c0_4 = arith.constant 0 : index
    %c0_5 = arith.constant 0 : index
    %6 = vector.load %arg4[%c0_4, %c0_5] : memref<1x512xf32, #tpu.memory_space<vmem>>, vector<1x512xf32>
    %7 = vector.broadcast %6 : vector<1x512xf32> to vector<16x512xf32>
    %8 = arith.addf %5, %7 : vector<16x512xf32>
    %cst_6 = arith.constant 0.000000e+00 : f32
    %9 = vector.broadcast %cst_6 : f32 to vector<16x512xf32>
    %10 = arith.maximumf %8, %9 : vector<16x512xf32>
    %c0_7 = arith.constant 0 : index
    %c0_8 = arith.constant 0 : index
    %11 = vector.load %arg8[%c0_7, %c0_8] : memref<16x512xf32, #tpu.memory_space<vmem>>, vector<16x512xf32>
    %12 = arith.truncf %10 : vector<16x512xf32> to vector<16x512xbf16>
    %c0_9 = arith.constant 0 : index
    %c0_10 = arith.constant 0 : index
    %13 = vector.load %arg5[%c0_9, %c0_10] : memref<512x512xbf16, #tpu.memory_space<vmem>>, vector<512x512xbf16>
    %cst_11 = arith.constant dense<0.000000e+00> : vector<16x512xf32>
    %14 = tpu.matmul %12, %13, %cst_11 {dimension_numbers = #tpu.dot_dimension_numbers<[1], [0], [0], [1], [0, 0, 1, 1], [], []>} : vector<16x512xbf16>, vector<512x512xbf16>, vector<16x512xf32> -> vector<16x512xf32>
    %15 = arith.addf %11, %14 : vector<16x512xf32>
    %c0_12 = arith.constant 0 : index
    %c0_13 = arith.constant 0 : index
    %16 = vector.load %arg8[%c0_12, %c0_13] : memref<16x512xf32, #tpu.memory_space<vmem>>, vector<16x512xf32>
    tpu.vector_store %arg8[%c0_12, %c0_13], %15 {strides = array<i32>} : memref<16x512xf32, #tpu.memory_space<vmem>>, vector<16x512xf32>,
    %c3_i32 = arith.constant 3 : i32
    %17 = arith.cmpi eq, %arg1, %c3_i32 : i32
    %18 = arith.extui %17 : i1 to i32
    %c0_i32_14 = arith.constant 0 : i32
    %19 = arith.cmpi ne, %18, %c0_i32_14 : i32
    scf.if %19 {
      %c0_15 = arith.constant 0 : index
      %c0_16 = arith.constant 0 : index
      %20 = vector.load %arg8[%c0_15, %c0_16] : memref<16x512xf32, #tpu.memory_space<vmem>>, vector<16x512xf32>
      %c0_17 = arith.constant 0 : index
      %c0_18 = arith.constant 0 : index
      %21 = vector.load %arg7[%c0_17, %c0_18] : memref<16x512xf32, #tpu.memory_space<vmem>>, vector<16x512xf32>
      tpu.vector_store %arg7[%c0_17, %c0_18], %20 {strides = array<i32>} : memref<16x512xf32, #tpu.memory_space<vmem>>, vector<16x512xf32>,
    } else {
    }
    return
  }
  func.func @transform_0(%arg0: i32, %arg1: i32) -> (i32, i32) {
    %c0_i32 = arith.constant 0 : i32
    %c0_i32_0 = arith.constant 0 : i32
    return %arg0, %c0_i32 : i32, i32
  }
  func.func @transform_1(%arg0: i32, %arg1: i32) -> (i32, i32) {
    %c0_i32 = arith.constant 0 : i32
    %c0_i32_0 = arith.constant 0 : i32
    return %c0_i32, %arg1 : i32, i32
  }
  func.func @transform_2(%arg0: i32, %arg1: i32) -> (i32, i32) {
    %c0_i32 = arith.constant 0 : i32
    %c0_i32_0 = arith.constant 0 : i32
    return %c0_i32, %arg1 : i32, i32
  }
  func.func @transform_3(%arg0: i32, %arg1: i32) -> (i32, i32) {
    %c0_i32 = arith.constant 0 : i32
    %c0_i32_0 = arith.constant 0 : i32
    return %arg1, %c0_i32 : i32, i32
  }
  func.func @transform_4(%arg0: i32, %arg1: i32) -> (i32, i32) {
    %c0_i32 = arith.constant 0 : i32
    %c0_i32_0 = arith.constant 0 : i32
    %c0_i32_1 = arith.constant 0 : i32
    return %c0_i32, %c0_i32_0 : i32, i32
  }
  func.func @transform_5(%arg0: i32, %arg1: i32) -> (i32, i32) {
    %c0_i32 = arith.constant 0 : i32
    %c0_i32_0 = arith.constant 0 : i32
    return %arg0, %c0_i32 : i32, i32
  }
}

</mosaic_0001>

<llo_original>
// kernel: tpu_custom_call.1
$region0: #{tpu_custom_call.1}
  #allocation0 [shape = 'u32[]', space=smem, size = 0x4, offset = 0x4, fixed_abs, tag = 'smem constant byte address 0x4 - core index']
  #allocation1 [shape = 'u32[72,128]{1,0:T(1,128)}', space=vmem, size = 0x9000, scoped, tag = 'internal scratch']
  #allocation2 [shape = 'f32[16,512]{1,0:T(8,128)}', space=vmem, size = 0x8000, scoped, tag = 'scratch operand']
  %s0 = inlined_call_operand.hbm [shape: bf16[16,512], index: 0, kind: input, shape index: {}]
  %s1 = inlined_call_operand.hbm [shape: bf16[512,2048], index: 1, kind: input, shape index: {}]
  %s2 = inlined_call_operand.hbm [shape: f32[1,2048], index: 2, kind: input, shape index: {}]
  %s3 = inlined_call_operand.hbm [shape: bf16[2048,512], index: 3, kind: input, shape index: {}]
  %s4 = inlined_call_operand.hbm [shape: f32[1,512], index: 4, kind: input, shape index: {}]
  %s5 = inlined_call_operand.hbm [shape: f32[16,512], index: 5, kind: output, shape index: {}]
  %s6 = sld [smem:[#allocation0]]
  $region81: #{tpu_custom_call.1} parent=0
    _
  %s8 = ssub.s32 1, %s6
  %s9 = scalar_select 0, %s8, %s6
  $region1: #{tpu_custom_call.1} parent=0
    #allocation3 [shape = 'u8[16384]{0}', space=vmem, size = 0x4000, scoped, tag = 'input window, operand 0, single buffered']
    #allocation4 [shape = 's32[2]{0}', space=sflag, size = 0x8, scoped, tag = 'scoped memory for tpu_custom_call.1']
    #allocation5 [shape = 's32[2]{0}', space=sflag, size = 0x8, scoped, tag = 'scoped memory for tpu_custom_call.1']
    #allocation6 [shape = 'u8[1048576]{0}', space=vmem, size = 0x100000, scoped, tag = 'input window, operand 1']
    #allocation7 [shape = 's32[2]{0}', space=sflag, size = 0x8, scoped, tag = 'scoped memory for tpu_custom_call.1']
    #allocation8 [shape = 'u8[4096]{0}', space=vmem, size = 0x1000, scoped, tag = 'input window, operand 2']
    #allocation9 [shape = 'u8[1048576]{0}', space=vmem, size = 0x100000, scoped, tag = 'input window, operand 3']
    #allocation10 [shape = 's32[2]{0}', space=sflag, size = 0x8, scoped, tag = 'scoped memory for tpu_custom_call.1']
    #allocation11 [shape = 'u8[2048]{0}', space=vmem, size = 0x800, scoped, tag = 'input window, operand 4, single buffered']
    #allocation12 [shape = 'u8[32768]{0}', space=vmem, size = 0x8000, scoped, tag = 'output window, operand 0, single buffered']
    %10 = vsyncpa [#allocation4], 0
    %11 = vsyncpa [#allocation7], 0
    %s12 = scalar_lea.sflag [#allocation7], 1
    %13 = vsyncpa %s12, 0
    %14 = vsyncpa [#allocation10], 0
    %s15 = scalar_lea.sflag [#allocation10], 1
    %16 = vsyncpa %s15, 0
    %17 = vsyncpa [#allocation5], 0
    loop: start=0, step=1, limit=6
    $region2: #{tpu_custom_call.1} parent=1 // loop_pre_header
      _
    $region3: #{tpu_custom_call.1} parent=1 // loop_header
      %s19 = sphi 0, %s23
      %p20 = scmp.ge.s32.totalorder %s19, 6
      %s26 = sphi 0, %s38
      %s27 = sphi 0, %s34
      %s28 = sphi 0, %s26
      %s29 = sphi 0, %s27
      %s30 = sphi 0, %s28
      %s31 = sphi 0, %s29
      %s41 = sphi 0, %s43
      %s44 = sphi 0, %s41
      %s45 = sphi 0, %s44
      %s61 = sphi 0, %s45
      %s67 = sphi 0, %s69
      %s70 = sphi 0, %s67
      %s71 = sphi 0, %s70
      %s87 = sphi 0, %s71
      %s93 = sphi 0, %s95
      %s96 = sphi 0, %s93
      %s97 = sphi 0, %s96
      %s113 = sphi 0, %s97
      %s119 = sphi 0, %s121
      %s122 = sphi 0, %s119
      %s123 = sphi 0, %s122
      %s139 = sphi 0, %s123
      %s143 = sphi 0, %s143
      %s145 = sphi 0, %s143
      %s146 = sphi 0, %s145
      %s160 = sphi 0, %s146
      %s166 = sphi 0, %s168
      %s169 = sphi 0, %s166
      %s170 = sphi 0, %s169
      %s186 = sphi 0, %s170
    $region4: #{tpu_custom_call.1} parent=1 // loop_header_branch
      %22 = sbr.rel (%p20) target = $region8
    $region5: #{tpu_custom_call.1} parent=1 // loop_body
      %s24 = ssub.s32 %s19, 1
      %s25 = ssub.s32 %s19, 2
      %s32 = sadd.s32 1, %s27
      %p33 = scmp.ge.s32.totalorder %s32, 4
      %s34 = scalar_select %p33, 0, %s32
      %s35 = sadd.s32 1, %s26
      %s36 = scalar_select %p33, %s35, %s26
      %p37 = scmp.ge.s32.totalorder %s36, 1
      %s38 = scalar_select %p37, 0, %s36
      %s39 = ssub.s32 %s26, %s38
      %p40 = scmp.eq.s32.totalorder %s39, 0
      %s42 = sadd.s32 %s41, 1
      %s43 = scalar_select %p40, %s41, %s42
      %p46 = pneg %p40
      %p47 = scmp.eq.s32.totalorder %s19, 3
      %p48 = por %p46, %p47
      %p49 = scmp.ne.s32.totalorder %s41, %s44
      %p50 = scmp.eq.s32.totalorder %s19, 0
      %p51 = por %p49, %p50
      %p52 = scmp.ne.s32.totalorder %s41, %s44
      %p53 = scmp.eq.s32.totalorder %s24, 3
      %p54 = por %p52, %p53
      %p55 = scmp.ne.s32.totalorder %s44, %s45
      %p56 = scmp.eq.s32.totalorder %s24, 0
      %p57 = por %p55, %p56
      %p58 = scmp.ne.s32.totalorder %s44, %s45
      %p59 = scmp.eq.s32.totalorder %s25, 3
      %p60 = por %p58, %p59
      %p62 = scmp.ne.s32.totalorder %s45, %s61
      %p63 = scmp.eq.s32.totalorder %s25, 0
      %p64 = por %p62, %p63
      %s65 = ssub.s32 %s27, %s34
      %p66 = scmp.eq.s32.totalorder %s65, 0
      %s68 = sadd.s32 %s67, 1
      %s69 = scalar_select %p66, %s67, %s68
      %p72 = pneg %p66
      %p73 = scmp.eq.s32.totalorder %s19, 3
      %p74 = por %p72, %p73
      %p75 = scmp.ne.s32.totalorder %s67, %s70
      %p76 = scmp.eq.s32.totalorder %s19, 0
      %p77 = por %p75, %p76
      %p78 = scmp.ne.s32.totalorder %s67, %s70
      %p79 = scmp.eq.s32.totalorder %s24, 3
      %p80 = por %p78, %p79
      %p81 = scmp.ne.s32.totalorder %s70, %s71
      %p82 = scmp.eq.s32.totalorder %s24, 0
      %p83 = por %p81, %p82
      %p84 = scmp.ne.s32.totalorder %s70, %s71
      %p85 = scmp.eq.s32.totalorder %s25, 3
      %p86 = por %p84, %p85
      %p88 = scmp.ne.s32.totalorder %s71, %s87
      %p89 = scmp.eq.s32.totalorder %s25, 0
      %p90 = por %p88, %p89
      %s91 = ssub.s32 %s27, %s34
      %p92 = scmp.eq.s32.totalorder %s91, 0
      %s94 = sadd.s32 %s93, 1
      %s95 = scalar_select %p92, %s93, %s94
      %p98 = pneg %p92
      %p99 = scmp.eq.s32.totalorder %s19, 3
      %p100 = por %p98, %p99
      %p101 = scmp.ne.s32.totalorder %s93, %s96
      %p102 = scmp.eq.s32.totalorder %s19, 0
      %p103 = por %p101, %p102
      %p104 = scmp.ne.s32.totalorder %s93, %s96
      %p105 = scmp.eq.s32.totalorder %s24, 3
      %p106 = por %p104, %p105
      %p107 = scmp.ne.s32.totalorder %s96, %s97
      %p108 = scmp.eq.s32.totalorder %s24, 0
      %p109 = por %p107, %p108
      %p110 = scmp.ne.s32.totalorder %s96, %s97
      %p111 = scmp.eq.s32.totalorder %s25, 3
      %p112 = por %p110, %p111
      %p114 = scmp.ne.s32.totalorder %s97, %s113
      %p115 = scmp.eq.s32.totalorder %s25, 0
      %p116 = por %p114, %p115
      %s117 = ssub.s32 %s27, %s34
      %p118 = scmp.eq.s32.totalorder %s117, 0
      %s120 = sadd.s32 %s119, 1
      %s121 = scalar_select %p118, %s119, %s120
      %p124 = pneg %p118
      %p125 = scmp.eq.s32.totalorder %s19, 3
      %p126 = por %p124, %p125
      %p127 = scmp.ne.s32.totalorder %s119, %s122
      %p128 = scmp.eq.s32.totalorder %s19, 0
      %p129 = por %p127, %p128
      %p130 = scmp.ne.s32.totalorder %s119, %s122
      %p131 = scmp.eq.s32.totalorder %s24, 3
      %p132 = por %p130, %p131
      %p133 = scmp.ne.s32.totalorder %s122, %s123
      %p134 = scmp.eq.s32.totalorder %s24, 0
      %p135 = por %p133, %p134
      %p136 = scmp.ne.s32.totalorder %s122, %s123
      %p137 = scmp.eq.s32.totalorder %s25, 3
      %p138 = por %p136, %p137
      %p140 = scmp.ne.s32.totalorder %s123, %s139
      %p141 = scmp.eq.s32.totalorder %s25, 0
      %p142 = por %p140, %p141
      %s144 = sadd.s32 %s143, 1
      %p147 = scmp.eq.s32.totalorder %s19, 3
      %p148 = scmp.ne.s32.totalorder %s143, %s145
      %p149 = scmp.eq.s32.totalorder %s19, 0
      %p150 = por %p148, %p149
      %p151 = scmp.ne.s32.totalorder %s143, %s145
      %p152 = scmp.eq.s32.totalorder %s24, 3
      %p153 = por %p151, %p152
      %p154 = scmp.ne.s32.totalorder %s145, %s146
      %p155 = scmp.eq.s32.totalorder %s24, 0
      %p156 = por %p154, %p155
      %p157 = scmp.ne.s32.totalorder %s145, %s146
      %p158 = scmp.eq.s32.totalorder %s25, 3
      %p159 = por %p157, %p158
      %p161 = scmp.ne.s32.totalorder %s146, %s160
      %p162 = scmp.eq.s32.totalorder %s25, 0
      %p163 = por %p161, %p162
      %s164 = ssub.s32 %s26, %s38
      %p165 = scmp.eq.s32.totalorder %s164, 0
      %s167 = sadd.s32 %s166, 1
      %s168 = scalar_select %p165, %s166, %s167
      %p171 = pneg %p165
      %p172 = scmp.eq.s32.totalorder %s19, 3
      %p173 = por %p171, %p172
      %p174 = scmp.ne.s32.totalorder %s166, %s169
      %p175 = scmp.eq.s32.totalorder %s19, 0
      %p176 = por %p174, %p175
      %p177 = scmp.ne.s32.totalorder %s166, %s169
      %p178 = scmp.eq.s32.totalorder %s24, 3
      %p179 = por %p177, %p178
      %p180 = scmp.ne.s32.totalorder %s169, %s170
      %p181 = scmp.eq.s32.totalorder %s24, 0
      %p182 = por %p180, %p181
      %p183 = scmp.ne.s32.totalorder %s169, %s170
      %p184 = scmp.eq.s32.totalorder %s25, 3
      %p185 = por %p183, %p184
      %p187 = scmp.ne.s32.totalorder %s170, %s186
      %p188 = scmp.eq.s32.totalorder %s25, 0
      %p189 = por %p187, %p188
      %p190 = scmp.le.s32.totalorder 1, %s19
      %p191 = scmp.lt.s32.totalorder %s19, 5
      %p192 = pnand %p190, %p191
      %p193 = pneg %p192
      // Predicated region
      $region9: #{tpu_custom_call.1} parent=5 // pred_check
        _
      $region10: #{tpu_custom_call.1} parent=5 // pred_check_branch
        %195 = sbr.rel (%p192) target = $region12
      $region11: #{tpu_custom_call.1} parent=5 // pred_region
        %s196 = ssub.s32 %s19, 1
        // Predicated region
        $region13: #{tpu_custom_call.1} parent=11 // pred_check
          %p197 = pneg %p57
        $region14: #{tpu_custom_call.1} parent=11 // pred_check_branch
          %199 = sbr.rel (%p197) target = $region16
        $region15: #{tpu_custom_call.1} parent=11 // pred_region
          %s200 = smul.u32 2, %s28
          %202 = vsyncadd [#allocation4], 0
          %s203 = smul.addr %s200, 4
          %s204 = smul.addr %s203, 4
          %s205 = scalar_lea.hbm %s0, %s204
          %s206 = sshll.u32 %s205, 4
          %s207 = int_to_ptr.hbm [resolvable:$true] %s206
          %s208 = sshll.u32 [#allocation3], 4
          %s209 = int_to_ptr.vmem [resolvable:$true] %s208
          %214 = dma.hbm_to_vmem [thread:$0]  %s207, 512, %s209, [#allocation4], 256, 256, 16
        $region16: #{tpu_custom_call.1} parent=11 // pred_fallthru
          _
        // Predicated region
        $region17: #{tpu_custom_call.1} parent=11 // pred_check
          %p215 = pneg %p156
        $region18: #{tpu_custom_call.1} parent=11 // pred_check_branch
          %217 = sbr.rel (%p215) target = $region20
        $region19: #{tpu_custom_call.1} parent=11 // pred_region
          %219 = vsyncadd [#allocation10], 0
          %s221 = sshll.u32 %s4, 4
          %s222 = int_to_ptr.hbm [resolvable:$true] %s221
          %s223 = sshll.u32 [#allocation11], 4
          %s224 = int_to_ptr.vmem [resolvable:$true] %s223
          %226 = dma.hbm_to_vmem [thread:$0]  %s222, 64, %s224, [#allocation10]
        $region20: #{tpu_custom_call.1} parent=11 // pred_fallthru
          _
      $region12: #{tpu_custom_call.1} parent=5 // pred_fallthru
        _
      %p227 = scmp.lt.s32.totalorder %s19, 4
      // Predicated region
      $region21: #{tpu_custom_call.1} parent=5 // pred_check
        %p228 = pneg %p227
      $region22: #{tpu_custom_call.1} parent=5 // pred_check_branch
        %230 = sbr.rel (%p228) target = $region24
      $region23: #{tpu_custom_call.1} parent=5 // pred_region
        // Predicated region
        $region25: #{tpu_custom_call.1} parent=23 // pred_check
          %p231 = pneg %p77
        $region26: #{tpu_custom_call.1} parent=23 // pred_check_branch
          %233 = sbr.rel (%p231) target = $region28
        $region27: #{tpu_custom_call.1} parent=23 // pred_region
          %s234 = sand.u32 %s19, 1
          %s235 = scalar_lea.sflag [#allocation7], %s234
          %s236 = sand.u32 %s67, 1
          %s237 = smul.addr %s236, 1024
          %s238 = scalar_lea.vmem [#allocation6], %s237
          %s239 = smul.u32 4, %s27
          %241 = vsyncadd %s235, 0
          %s242 = smul.addr %s239, 4
          %s243 = scalar_lea.hbm %s1, %s242
          %s244 = sshll.u32 %s243, 4
          %s245 = int_to_ptr.hbm [resolvable:$true] %s244
          %s246 = sshll.u32 %s238, 4
          %s247 = int_to_ptr.vmem [resolvable:$true] %s246
          %252 = dma.hbm_to_vmem [thread:$0]  %s245, 16384, %s247, %s235, 1024, 256, 16
        $region28: #{tpu_custom_call.1} parent=23 // pred_fallthru
          _
        // Predicated region
        $region29: #{tpu_custom_call.1} parent=23 // pred_check
          %p253 = pneg %p103
        $region30: #{tpu_custom_call.1} parent=23 // pred_check_branch
          %255 = sbr.rel (%p253) target = $region32
        $region31: #{tpu_custom_call.1} parent=23 // pred_region
          %s256 = sand.u32 %s19, 1
          %s257 = scalar_lea.sflag [#allocation7], %s256
          %s258 = sand.u32 %s93, 1
          %s259 = smul.addr %s258, 4
          %s260 = scalar_lea.vmem [#allocation8], %s259
          %s261 = smul.u32 4, %s27
          %263 = vsyncadd %s257, 0
          %s264 = scalar_lea.hbm %s2, %s261
          %s266 = sshll.u32 %s264, 4
          %s267 = int_to_ptr.hbm [resolvable:$true] %s266
          %s268 = sshll.u32 %s260, 4
          %s269 = int_to_ptr.vmem [resolvable:$true] %s268
          %271 = dma.hbm_to_vmem [thread:$0]  %s267, 64, %s269, %s257
        $region32: #{tpu_custom_call.1} parent=23 // pred_fallthru
          _
        // Predicated region
        $region33: #{tpu_custom_call.1} parent=23 // pred_check
          %p272 = pneg %p129
        $region34: #{tpu_custom_call.1} parent=23 // pred_check_branch
          %274 = sbr.rel (%p272) target = $region36
        $region35: #{tpu_custom_call.1} parent=23 // pred_region
          %s275 = sand.u32 %s19, 1
          %s276 = scalar_lea.sflag [#allocation10], %s275
          %s277 = sand.u32 %s119, 1
          %s278 = smul.addr %s277, 1024
          %s279 = scalar_lea.vmem [#allocation9], %s278
          %s280 = smul.u32 64, %s27
          %282 = vsyncadd %s276, 0
          %s283 = smul.addr %s280, 4
          %s284 = smul.addr %s283, 4
          %s285 = scalar_lea.hbm %s3, %s284
          %s286 = sshll.u32 %s285, 4
          %s287 = int_to_ptr.hbm [resolvable:$true] %s286
          %s288 = sshll.u32 %s279, 4
          %s289 = int_to_ptr.vmem [resolvable:$true] %s288
          %294 = dma.hbm_to_vmem [thread:$0]  %s287, 16384, %s289, %s276, 256, 256, 16
        $region36: #{tpu_custom_call.1} parent=23 // pred_fallthru
          _
      $region24: #{tpu_custom_call.1} parent=5 // pred_fallthru
        _
      %p295 = scmp.le.s32.totalorder 1, %s19
      %p296 = scmp.lt.s32.totalorder %s19, 5
      %p297 = pnand %p295, %p296
      %p298 = pneg %p297
      // Predicated region
      $region37: #{tpu_custom_call.1} parent=5 // pred_check
        _
      $region38: #{tpu_custom_call.1} parent=5 // pred_check_branch
        %300 = sbr.rel (%p297) target = $region40
      $region39: #{tpu_custom_call.1} parent=5 // pred_region
        %s301 = ssub.s32 %s19, 1
        // Predicated region
        $region41: #{tpu_custom_call.1} parent=39 // pred_check
          %p302 = pneg %p57
        $region42: #{tpu_custom_call.1} parent=39 // pred_check_branch
          %304 = sbr.rel (%p302) target = $region44
        $region43: #{tpu_custom_call.1} parent=39 // pred_region
          %306 = dma.done [#allocation4], 512
        $region44: #{tpu_custom_call.1} parent=39 // pred_fallthru
          _
        %s307 = sand.u32 %s24, 1
        %s308 = scalar_lea.sflag [#allocation7], %s307
        %s309 = sand.u32 %s70, 1
        %s310 = smul.addr %s309, 1024
        %s311 = scalar_lea.vmem [#allocation6], %s310
        // Predicated region
        $region45: #{tpu_custom_call.1} parent=39 // pred_check
          %p312 = pneg %p83
        $region46: #{tpu_custom_call.1} parent=39 // pred_check_branch
          %314 = sbr.rel (%p312) target = $region48
        $region47: #{tpu_custom_call.1} parent=39 // pred_region
          %316 = dma.done %s308, 16384
        $region48: #{tpu_custom_call.1} parent=39 // pred_fallthru
          _
        %s317 = sand.u32 %s24, 1
        %s318 = scalar_lea.sflag [#allocation7], %s317
        %s319 = sand.u32 %s96, 1
        %s320 = smul.addr %s319, 4
        %s321 = scalar_lea.vmem [#allocation8], %s320
        // Predicated region
        $region49: #{tpu_custom_call.1} parent=39 // pred_check
          %p322 = pneg %p109
        $region50: #{tpu_custom_call.1} parent=39 // pred_check_branch
          %324 = sbr.rel (%p322) target = $region52
        $region51: #{tpu_custom_call.1} parent=39 // pred_region
          %326 = dma.done %s318, 64
        $region52: #{tpu_custom_call.1} parent=39 // pred_fallthru
          _
        %s327 = sand.u32 %s24, 1
        %s328 = scalar_lea.sflag [#allocation10], %s327
        %s329 = sand.u32 %s122, 1
        %s330 = smul.addr %s329, 1024
        %s331 = scalar_lea.vmem [#allocation9], %s330
        // Predicated region
        $region53: #{tpu_custom_call.1} parent=39 // pred_check
          %p332 = pneg %p135
        $region54: #{tpu_custom_call.1} parent=39 // pred_check_branch
          %334 = sbr.rel (%p332) target = $region56
        $region55: #{tpu_custom_call.1} parent=39 // pred_region
          %336 = dma.done %s328, 16384
        $region56: #{tpu_custom_call.1} parent=39 // pred_fallthru
          _
        // Predicated region
        $region57: #{tpu_custom_call.1} parent=39 // pred_check
          %p337 = pneg %p156
        $region58: #{tpu_custom_call.1} parent=39 // pred_check_branch
          %339 = sbr.rel (%p337) target = $region60
        $region59: #{tpu_custom_call.1} parent=39 // pred_region
          %341 = dma.done [#allocation10], 64
        $region60: #{tpu_custom_call.1} parent=39 // pred_fallthru
          _
        %p342 = pneg %p57
        %p343 = pneg %p54
        %s344 = sand.u32 %s24, 1
        %s345 = scalar_lea.sflag [#allocation7], %s344
        %s346 = sand.u32 %s70, 1
        %s347 = smul.addr %s346, 1024
        %s348 = scalar_lea.vmem [#allocation6], %s347
        %p349 = pneg %p83
        %p350 = pneg %p80
        %s351 = sand.u32 %s24, 1
        %s352 = scalar_lea.sflag [#allocation7], %s351
        %s353 = sand.u32 %s96, 1
        %s354 = smul.addr %s353, 4
        %s355 = scalar_lea.vmem [#allocation8], %s354
        %p356 = pneg %p109
        %p357 = pneg %p106
        %s358 = sand.u32 %s24, 1
        %s359 = scalar_lea.sflag [#allocation10], %s358
        %s360 = sand.u32 %s122, 1
        %s361 = smul.addr %s360, 1024
        %s362 = scalar_lea.vmem [#allocation9], %s361
        %p363 = pneg %p135
        %p364 = pneg %p132
        %p365 = pneg %p156
        %p366 = pneg %p153
        %p367 = pneg %p182
        %p368 = pneg %p179
        %s369 = smul.u32 2, %s28
        %s370 = smul.u32 4, %s29
        %s371 = smul.u32 4, %s29
        %s372 = smul.u32 64, %s29
        %s373 = smul.u32 2, %s28
        %p374 = scmp.eq.s32.totalorder %s29, 0
        // Predicated region
        $region61: #{tpu_custom_call.1} parent=39 // pred_check
          %p375 = pneg %p374
        $region62: #{tpu_custom_call.1} parent=39 // pred_check_branch
          %377 = sbr.rel (%p375) target = $region64
        $region63: #{tpu_custom_call.1} parent=39 // pred_region
          %v378 = vld [vmem:[#allocation11] sm:$0xf]
          %v380 = vperm.slane %v378, 0
          %v381 = vperm.slane %v378, 1
          %v382 = vperm.slane %v378, 2
          %v383 = vperm.slane %v378, 3
          %388 = vst [vmem:[#allocation2] sm:$0xff] %v380
          %389 = vst [vmem:[#allocation2 + $0x8] sm:$0xff] %v381
          %390 = vst [vmem:[#allocation2 + $0x10] sm:$0xff] %v382
          %391 = vst [vmem:[#allocation2 + $0x18] sm:$0xff] %v383
          %392 = vst [vmem:[#allocation2 + $0x20] sm:$0xff] %v380
          %393 = vst [vmem:[#allocation2 + $0x28] sm:$0xff] %v381
          %394 = vst [vmem:[#allocation2 + $0x30] sm:$0xff] %v382
          %395 = vst [vmem:[#allocation2 + $0x38] sm:$0xff] %v383
        $region64: #{tpu_custom_call.1} parent=39 // pred_fallthru
          _
        %v396 = vld [vmem:[#allocation3] sm:$0xff]
        %v397 = vld [vmem:[#allocation3 + $0x8] sm:$0xff]
        %v398 = vld [vmem:[#allocation3 + $0x10] sm:$0xff]
        %v399 = vld [vmem:[#allocation3 + $0x18] sm:$0xff]
        %v400 = vld [vmem:[%s311] sm:$0xff]
        %v401 = vld [vmem:[%s311 + $0x8] sm:$0xff]
        %v402 = vld [vmem:[%s311 + $0x10] sm:$0xff]
        %v403 = vld [vmem:[%s311 + $0x18] sm:$0xff]
        %v404 = vld [vmem:[%s311 + $0x20] sm:$0xff]
        %v405 = vld [vmem:[%s311 + $0x28] sm:$0xff]
        %v406 = vld [vmem:[%s311 + $0x30] sm:$0xff]
        %v407 = vld [vmem:[%s311 + $0x38] sm:$0xff]
        %v408 = vld [vmem:[%s311 + $0x40] sm:$0xff]
        %v409 = vld [vmem:[%s311 + $0x48] sm:$0xff]
        %v410 = vld [vmem:[%s311 + $0x50] sm:$0xff]
        %v411 = vld [vmem:[%s311 + $0x58] sm:$0xff]
        %v412 = vld [vmem:[%s311 + $0x60] sm:$0xff]
        %v413 = vld [vmem:[%s311 + $0x68] sm:$0xff]
        %v414 = vld [vmem:[%s311 + $0x70] sm:$0xff]
        %v415 = vld [vmem:[%s311 + $0x78] sm:$0xff]
        %v416 = vld [vmem:[%s311 + $0x80] sm:$0xff]
        %v417 = vld [vmem:[%s311 + $0x88] sm:$0xff]
        %v418 = vld [vmem:[%s311 + $0x90] sm:$0xff]
        %v419 = vld [vmem:[%s311 + $0x98] sm:$0xff]
        %v420 = vld [vmem:[%s311 + $0xa0] sm:$0xff]
        %v421 = vld [vmem:[%s311 + $0xa8] sm:$0xff]
        %v422 = vld [vmem:[%s311 + $0xb0] sm:$0xff]
        %v423 = vld [vmem:[%s311 + $0xb8] sm:$0xff]
        %v424 = vld [vmem:[%s311 + $0xc0] sm:$0xff]
        %v425 = vld [vmem:[%s311 + $0xc8] sm:$0xff]
        %v426 = vld [vmem:[%s311 + $0xd0] sm:$0xff]
        %v427 = vld [vmem:[%s311 + $0xd8] sm:$0xff]
        %v428 = vld [vmem:[%s311 + $0xe0] sm:$0xff]
        %v429 = vld [vmem:[%s311 + $0xe8] sm:$0xff]
        %v430 = vld [vmem:[%s311 + $0xf0] sm:$0xff]
        %v431 = vld [vmem:[%s311 + $0xf8] sm:$0xff]
        %v432 = vld [vmem:[%s311 + $0x100] sm:$0xff]
        %v433 = vld [vmem:[%s311 + $0x108] sm:$0xff]
        %v434 = vld [vmem:[%s311 + $0x110] sm:$0xff]
        %v435 = vld [vmem:[%s311 + $0x118] sm:$0xff]
        %v436 = vld [vmem:[%s311 + $0x120] sm:$0xff]
        %v437 = vld [vmem:[%s311 + $0x128] sm:$0xff]
        %v438 = vld [vmem:[%s311 + $0x130] sm:$0xff]
        %v439 = vld [vmem:[%s311 + $0x138] sm:$0xff]
        %v440 = vld [vmem:[%s311 + $0x140] sm:$0xff]
        %v441 = vld [vmem:[%s311 + $0x148] sm:$0xff]
        %v442 = vld [vmem:[%s311 + $0x150] sm:$0xff]
        %v443 = vld [vmem:[%s311 + $0x158] sm:$0xff]
        %v444 = vld [vmem:[%s311 + $0x160] sm:$0xff]
        %v445 = vld [vmem:[%s311 + $0x168] sm:$0xff]
        %v446 = vld [vmem:[%s311 + $0x170] sm:$0xff]
        %v447 = vld [vmem:[%s311 + $0x178] sm:$0xff]
        %v448 = vld [vmem:[%s311 + $0x180] sm:$0xff]
        %v449 = vld [vmem:[%s311 + $0x188] sm:$0xff]
        %v450 = vld [vmem:[%s311 + $0x190] sm:$0xff]
        %v451 = vld [vmem:[%s311 + $0x198] sm:$0xff]
        %v452 = vld [vmem:[%s311 + $0x1a0] sm:$0xff]
        %v453 = vld [vmem:[%s311 + $0x1a8] sm:$0xff]
        %v454 = vld [vmem:[%s311 + $0x1b0] sm:$0xff]
        %v455 = vld [vmem:[%s311 + $0x1b8] sm:$0xff]
        %v456 = vld [vmem:[%s311 + $0x1c0] sm:$0xff]
        %v457 = vld [vmem:[%s311 + $0x1c8] sm:$0xff]
        %v458 = vld [vmem:[%s311 + $0x1d0] sm:$0xff]
        %v459 = vld [vmem:[%s311 + $0x1d8] sm:$0xff]
        %v460 = vld [vmem:[%s311 + $0x1e0] sm:$0xff]
        %v461 = vld [vmem:[%s311 + $0x1e8] sm:$0xff]
        %v462 = vld [vmem:[%s311 + $0x1f0] sm:$0xff]
        %v463 = vld [vmem:[%s311 + $0x1f8] sm:$0xff]
        %v464 = vld [vmem:[%s311 + $0x200] sm:$0xff]
        %v465 = vld [vmem:[%s311 + $0x208] sm:$0xff]
        %v466 = vld [vmem:[%s311 + $0x210] sm:$0xff]
        %v467 = vld [vmem:[%s311 + $0x218] sm:$0xff]
        %v468 = vld [vmem:[%s311 + $0x220] sm:$0xff]
        %v469 = vld [vmem:[%s311 + $0x228] sm:$0xff]
        %v470 = vld [vmem:[%s311 + $0x230] sm:$0xff]
        %v471 = vld [vmem:[%s311 + $0x238] sm:$0xff]
        %v472 = vld [vmem:[%s311 + $0x240] sm:$0xff]
        %v473 = vld [vmem:[%s311 + $0x248] sm:$0xff]
        %v474 = vld [vmem:[%s311 + $0x250] sm:$0xff]
        %v475 = vld [vmem:[%s311 + $0x258] sm:$0xff]
        %v476 = vld [vmem:[%s311 + $0x260] sm:$0xff]
        %v477 = vld [vmem:[%s311 + $0x268] sm:$0xff]
        %v478 = vld [vmem:[%s311 + $0x270] sm:$0xff]
        %v479 = vld [vmem:[%s311 + $0x278] sm:$0xff]
        %v480 = vld [vmem:[%s311 + $0x280] sm:$0xff]
        %v481 = vld [vmem:[%s311 + $0x288] sm:$0xff]
        %v482 = vld [vmem:[%s311 + $0x290] sm:$0xff]
        %v483 = vld [vmem:[%s311 + $0x298] sm:$0xff]
        %v484 = vld [vmem:[%s311 + $0x2a0] sm:$0xff]
        %v485 = vld [vmem:[%s311 + $0x2a8] sm:$0xff]
        %v486 = vld [vmem:[%s311 + $0x2b0] sm:$0xff]
        %v487 = vld [vmem:[%s311 + $0x2b8] sm:$0xff]
        %v488 = vld [vmem:[%s311 + $0x2c0] sm:$0xff]
        %v489 = vld [vmem:[%s311 + $0x2c8] sm:$0xff]
        %v490 = vld [vmem:[%s311 + $0x2d0] sm:$0xff]
        %v491 = vld [vmem:[%s311 + $0x2d8] sm:$0xff]
        %v492 = vld [vmem:[%s311 + $0x2e0] sm:$0xff]
        %v493 = vld [vmem:[%s311 + $0x2e8] sm:$0xff]
        %v494 = vld [vmem:[%s311 + $0x2f0] sm:$0xff]
        %v495 = vld [vmem:[%s311 + $0x2f8] sm:$0xff]
        %v496 = vld [vmem:[%s311 + $0x300] sm:$0xff]
        %v497 = vld [vmem:[%s311 + $0x308] sm:$0xff]
        %v498 = vld [vmem:[%s311 + $0x310] sm:$0xff]
        %v499 = vld [vmem:[%s311 + $0x318] sm:$0xff]
        %v500 = vld [vmem:[%s311 + $0x320] sm:$0xff]
        %v501 = vld [vmem:[%s311 + $0x328] sm:$0xff]
        %v502 = vld [vmem:[%s311 + $0x330] sm:$0xff]
        %v503 = vld [vmem:[%s311 + $0x338] sm:$0xff]
        %v504 = vld [vmem:[%s311 + $0x340] sm:$0xff]
        %v505 = vld [vmem:[%s311 + $0x348] sm:$0xff]
        %v506 = vld [vmem:[%s311 + $0x350] sm:$0xff]
        %v507 = vld [vmem:[%s311 + $0x358] sm:$0xff]
        %v508 = vld [vmem:[%s311 + $0x360] sm:$0xff]
        %v509 = vld [vmem:[%s311 + $0x368] sm:$0xff]
        %v510 = vld [vmem:[%s311 + $0x370] sm:$0xff]
        %v511 = vld [vmem:[%s311 + $0x378] sm:$0xff]
        %v512 = vld [vmem:[%s311 + $0x380] sm:$0xff]
        %v513 = vld [vmem:[%s311 + $0x388] sm:$0xff]
        %v514 = vld [vmem:[%s311 + $0x390] sm:$0xff]
        %v515 = vld [vmem:[%s311 + $0x398] sm:$0xff]
        %v516 = vld [vmem:[%s311 + $0x3a0] sm:$0xff]
        %v517 = vld [vmem:[%s311 + $0x3a8] sm:$0xff]
        %v518 = vld [vmem:[%s311 + $0x3b0] sm:$0xff]
        %v519 = vld [vmem:[%s311 + $0x3b8] sm:$0xff]
        %v520 = vld [vmem:[%s311 + $0x3c0] sm:$0xff]
        %v521 = vld [vmem:[%s311 + $0x3c8] sm:$0xff]
        %v522 = vld [vmem:[%s311 + $0x3d0] sm:$0xff]
        %v523 = vld [vmem:[%s311 + $0x3d8] sm:$0xff]
        %v524 = vld [vmem:[%s311 + $0x3e0] sm:$0xff]
        %v525 = vld [vmem:[%s311 + $0x3e8] sm:$0xff]
        %v526 = vld [vmem:[%s311 + $0x3f0] sm:$0xff]
        %v527 = vld [vmem:[%s311 + $0x3f8] sm:$0xff]
        %v528 = vld [vmem:[%s321] sm:$0xf]
        %v530 = vperm.slane %v528, 0
        %v531 = vperm.slane %v528, 1
        %v532 = vperm.slane %v528, 2
        %v533 = vperm.slane %v528, 3
        %v542 = vunpack.c.l.b16 %v396
        %v543 = vunpack.c.h.b16 %v396
        %v544 = vunpack.c.l.b16 %v397
        %v545 = vunpack.c.h.b16 %v397
        %v546 = vunpack.c.l.b16 %v398
        %v547 = vunpack.c.h.b16 %v398
        %v548 = vunpack.c.l.b16 %v399
        %v549 = vunpack.c.h.b16 %v399
        %v550 = vpack.c.b16 %v546, %v542
        %v551 = vpack.c.b16 %v547, %v543
        %v552 = vpack.c.b16 %v548, %v544
        %v553 = vpack.c.b16 %v549, %v545
        %v686 = vunpack.c.l.b16 %v400
        %v687 = vunpack.c.h.b16 %v400
        %v688 = vunpack.c.l.b16 %v401
        %v689 = vunpack.c.h.b16 %v401
        %v690 = vunpack.c.l.b16 %v402
        %v691 = vunpack.c.h.b16 %v402
        %v692 = vunpack.c.l.b16 %v403
        %v693 = vunpack.c.h.b16 %v403
        %v694 = vunpack.c.l.b16 %v404
        %v695 = vunpack.c.h.b16 %v404
        %v696 = vunpack.c.l.b16 %v405
        %v697 = vunpack.c.h.b16 %v405
        %v698 = vunpack.c.l.b16 %v406
        %v699 = vunpack.c.h.b16 %v406
        %v700 = vunpack.c.l.b16 %v407
        %v701 = vunpack.c.h.b16 %v407
        %v702 = vunpack.c.l.b16 %v408
        %v703 = vunpack.c.h.b16 %v408
        %v704 = vunpack.c.l.b16 %v409
        %v705 = vunpack.c.h.b16 %v409
        %v706 = vunpack.c.l.b16 %v410
        %v707 = vunpack.c.h.b16 %v410
        %v708 = vunpack.c.l.b16 %v411
        %v709 = vunpack.c.h.b16 %v411
        %v710 = vunpack.c.l.b16 %v412
        %v711 = vunpack.c.h.b16 %v412
        %v712 = vunpack.c.l.b16 %v413
        %v713 = vunpack.c.h.b16 %v413
        %v714 = vunpack.c.l.b16 %v414
        %v715 = vunpack.c.h.b16 %v414
        %v716 = vunpack.c.l.b16 %v415
        %v717 = vunpack.c.h.b16 %v415
        %v718 = vunpack.c.l.b16 %v416
        %v719 = vunpack.c.h.b16 %v416
        %v720 = vunpack.c.l.b16 %v417
        %v721 = vunpack.c.h.b16 %v417
        %v722 = vunpack.c.l.b16 %v418
        %v723 = vunpack.c.h.b16 %v418
        %v724 = vunpack.c.l.b16 %v419
        %v725 = vunpack.c.h.b16 %v419
        %v726 = vunpack.c.l.b16 %v420
        %v727 = vunpack.c.h.b16 %v420
        %v728 = vunpack.c.l.b16 %v421
        %v729 = vunpack.c.h.b16 %v421
        %v730 = vunpack.c.l.b16 %v422
        %v731 = vunpack.c.h.b16 %v422
        %v732 = vunpack.c.l.b16 %v423
        %v733 = vunpack.c.h.b16 %v423
        %v734 = vunpack.c.l.b16 %v424
        %v735 = vunpack.c.h.b16 %v424
        %v736 = vunpack.c.l.b16 %v425
        %v737 = vunpack.c.h.b16 %v425
        %v738 = vunpack.c.l.b16 %v426
        %v739 = vunpack.c.h.b16 %v426
        %v740 = vunpack.c.l.b16 %v427
        %v741 = vunpack.c.h.b16 %v427
        %v742 = vunpack.c.l.b16 %v428
        %v743 = vunpack.c.h.b16 %v428
        %v744 = vunpack.c.l.b16 %v429
        %v745 = vunpack.c.h.b16 %v429
        %v746 = vunpack.c.l.b16 %v430
        %v747 = vunpack.c.h.b16 %v430
        %v748 = vunpack.c.l.b16 %v431
        %v749 = vunpack.c.h.b16 %v431
        %v750 = vunpack.c.l.b16 %v432
        %v751 = vunpack.c.h.b16 %v432
        %v752 = vunpack.c.l.b16 %v433
        %v753 = vunpack.c.h.b16 %v433
        %v754 = vunpack.c.l.b16 %v434
        %v755 = vunpack.c.h.b16 %v434
        %v756 = vunpack.c.l.b16 %v435
        %v757 = vunpack.c.h.b16 %v435
        %v758 = vunpack.c.l.b16 %v436
        %v759 = vunpack.c.h.b16 %v436
        %v760 = vunpack.c.l.b16 %v437
        %v761 = vunpack.c.h.b16 %v437
        %v762 = vunpack.c.l.b16 %v438
        %v763 = vunpack.c.h.b16 %v438
        %v764 = vunpack.c.l.b16 %v439
        %v765 = vunpack.c.h.b16 %v439
        %v766 = vunpack.c.l.b16 %v440
        %v767 = vunpack.c.h.b16 %v440
        %v768 = vunpack.c.l.b16 %v441
        %v769 = vunpack.c.h.b16 %v441
        %v770 = vunpack.c.l.b16 %v442
        %v771 = vunpack.c.h.b16 %v442
        %v772 = vunpack.c.l.b16 %v443
        %v773 = vunpack.c.h.b16 %v443
        %v774 = vunpack.c.l.b16 %v444
        %v775 = vunpack.c.h.b16 %v444
        %v776 = vunpack.c.l.b16 %v445
        %v777 = vunpack.c.h.b16 %v445
        %v778 = vunpack.c.l.b16 %v446
        %v779 = vunpack.c.h.b16 %v446
        %v780 = vunpack.c.l.b16 %v447
        %v781 = vunpack.c.h.b16 %v447
        %v782 = vunpack.c.l.b16 %v448
        %v783 = vunpack.c.h.b16 %v448
        %v784 = vunpack.c.l.b16 %v449
        %v785 = vunpack.c.h.b16 %v449
        %v786 = vunpack.c.l.b16 %v450
        %v787 = vunpack.c.h.b16 %v450
        %v788 = vunpack.c.l.b16 %v451
        %v789 = vunpack.c.h.b16 %v451
        %v790 = vunpack.c.l.b16 %v452
        %v791 = vunpack.c.h.b16 %v452
        %v792 = vunpack.c.l.b16 %v453
        %v793 = vunpack.c.h.b16 %v453
        %v794 = vunpack.c.l.b16 %v454
        %v795 = vunpack.c.h.b16 %v454
        %v796 = vunpack.c.l.b16 %v455
        %v797 = vunpack.c.h.b16 %v455
        %v798 = vunpack.c.l.b16 %v456
        %v799 = vunpack.c.h.b16 %v456
        %v800 = vunpack.c.l.b16 %v457
        %v801 = vunpack.c.h.b16 %v457
        %v802 = vunpack.c.l.b16 %v458
        %v803 = vunpack.c.h.b16 %v458
        %v804 = vunpack.c.l.b16 %v459
        %v805 = vunpack.c.h.b16 %v459
        %v806 = vunpack.c.l.b16 %v460
        %v807 = vunpack.c.h.b16 %v460
        %v808 = vunpack.c.l.b16 %v461
        %v809 = vunpack.c.h.b16 %v461
        %v810 = vunpack.c.l.b16 %v462
        %v811 = vunpack.c.h.b16 %v462
        %v812 = vunpack.c.l.b16 %v463
        %v813 = vunpack.c.h.b16 %v463
        %v814 = vunpack.c.l.b16 %v464
        %v815 = vunpack.c.h.b16 %v464
        %v816 = vunpack.c.l.b16 %v465
        %v817 = vunpack.c.h.b16 %v465
        %v818 = vunpack.c.l.b16 %v466
        %v819 = vunpack.c.h.b16 %v466
        %v820 = vunpack.c.l.b16 %v467
        %v821 = vunpack.c.h.b16 %v467
        %v822 = vunpack.c.l.b16 %v468
        %v823 = vunpack.c.h.b16 %v468
        %v824 = vunpack.c.l.b16 %v469
        %v825 = vunpack.c.h.b16 %v469
        %v826 = vunpack.c.l.b16 %v470
        %v827 = vunpack.c.h.b16 %v470
        %v828 = vunpack.c.l.b16 %v471
        %v829 = vunpack.c.h.b16 %v471
        %v830 = vunpack.c.l.b16 %v472
        %v831 = vunpack.c.h.b16 %v472
        %v832 = vunpack.c.l.b16 %v473
        %v833 = vunpack.c.h.b16 %v473
        %v834 = vunpack.c.l.b16 %v474
        %v835 = vunpack.c.h.b16 %v474
        %v836 = vunpack.c.l.b16 %v475
        %v837 = vunpack.c.h.b16 %v475
        %v838 = vunpack.c.l.b16 %v476
        %v839 = vunpack.c.h.b16 %v476
        %v840 = vunpack.c.l.b16 %v477
        %v841 = vunpack.c.h.b16 %v477
        %v842 = vunpack.c.l.b16 %v478
        %v843 = vunpack.c.h.b16 %v478
        %v844 = vunpack.c.l.b16 %v479
        %v845 = vunpack.c.h.b16 %v479
        %v846 = vunpack.c.l.b16 %v480
        %v847 = vunpack.c.h.b16 %v480
        %v848 = vunpack.c.l.b16 %v481
        %v849 = vunpack.c.h.b16 %v481
        %v850 = vunpack.c.l.b16 %v482
        %v851 = vunpack.c.h.b16 %v482
        %v852 = vunpack.c.l.b16 %v483
        %v853 = vunpack.c.h.b16 %v483
        %v854 = vunpack.c.l.b16 %v484
        %v855 = vunpack.c.h.b16 %v484
        %v856 = vunpack.c.l.b16 %v485
        %v857 = vunpack.c.h.b16 %v485
        %v858 = vunpack.c.l.b16 %v486
        %v859 = vunpack.c.h.b16 %v486
        %v860 = vunpack.c.l.b16 %v487
        %v861 = vunpack.c.h.b16 %v487
        %v862 = vunpack.c.l.b16 %v488
        %v863 = vunpack.c.h.b16 %v488
        %v864 = vunpack.c.l.b16 %v489
        %v865 = vunpack.c.h.b16 %v489
        %v866 = vunpack.c.l.b16 %v490
        %v867 = vunpack.c.h.b16 %v490
        %v868 = vunpack.c.l.b16 %v491
        %v869 = vunpack.c.h.b16 %v491
        %v870 = vunpack.c.l.b16 %v492
        %v871 = vunpack.c.h.b16 %v492
        %v872 = vunpack.c.l.b16 %v493
        %v873 = vunpack.c.h.b16 %v493
        %v874 = vunpack.c.l.b16 %v494
        %v875 = vunpack.c.h.b16 %v494
        %v876 = vunpack.c.l.b16 %v495
        %v877 = vunpack.c.h.b16 %v495
        %v878 = vunpack.c.l.b16 %v496
        %v879 = vunpack.c.h.b16 %v496
        %v880 = vunpack.c.l.b16 %v497
        %v881 = vunpack.c.h.b16 %v497
        %v882 = vunpack.c.l.b16 %v498
        %v883 = vunpack.c.h.b16 %v498
        %v884 = vunpack.c.l.b16 %v499
        %v885 = vunpack.c.h.b16 %v499
        %v886 = vunpack.c.l.b16 %v500
        %v887 = vunpack.c.h.b16 %v500
        %v888 = vunpack.c.l.b16 %v501
        %v889 = vunpack.c.h.b16 %v501
        %v890 = vunpack.c.l.b16 %v502
        %v891 = vunpack.c.h.b16 %v502
        %v892 = vunpack.c.l.b16 %v503
        %v893 = vunpack.c.h.b16 %v503
        %v894 = vunpack.c.l.b16 %v504
        %v895 = vunpack.c.h.b16 %v504
        %v896 = vunpack.c.l.b16 %v505
        %v897 = vunpack.c.h.b16 %v505
        %v898 = vunpack.c.l.b16 %v506
        %v899 = vunpack.c.h.b16 %v506
        %v900 = vunpack.c.l.b16 %v507
        %v901 = vunpack.c.h.b16 %v507
        %v902 = vunpack.c.l.b16 %v508
        %v903 = vunpack.c.h.b16 %v508
        %v904 = vunpack.c.l.b16 %v509
        %v905 = vunpack.c.h.b16 %v509
        %v906 = vunpack.c.l.b16 %v510
        %v907 = vunpack.c.h.b16 %v510
        %v908 = vunpack.c.l.b16 %v511
        %v909 = vunpack.c.h.b16 %v511
        %v910 = vunpack.c.l.b16 %v512
        %v911 = vunpack.c.h.b16 %v512
        %v912 = vunpack.c.l.b16 %v513
        %v913 = vunpack.c.h.b16 %v513
        %v914 = vunpack.c.l.b16 %v514
        %v915 = vunpack.c.h.b16 %v514
        %v916 = vunpack.c.l.b16 %v515
        %v917 = vunpack.c.h.b16 %v515
        %v918 = vunpack.c.l.b16 %v516
        %v919 = vunpack.c.h.b16 %v516
        %v920 = vunpack.c.l.b16 %v517
        %v921 = vunpack.c.h.b16 %v517
        %v922 = vunpack.c.l.b16 %v518
        %v923 = vunpack.c.h.b16 %v518
        %v924 = vunpack.c.l.b16 %v519
        %v925 = vunpack.c.h.b16 %v519
        %v926 = vunpack.c.l.b16 %v520
        %v927 = vunpack.c.h.b16 %v520
        %v928 = vunpack.c.l.b16 %v521
        %v929 = vunpack.c.h.b16 %v521
        %v930 = vunpack.c.l.b16 %v522
        %v931 = vunpack.c.h.b16 %v522
        %v932 = vunpack.c.l.b16 %v523
        %v933 = vunpack.c.h.b16 %v523
        %v934 = vunpack.c.l.b16 %v524
        %v935 = vunpack.c.h.b16 %v524
        %v936 = vunpack.c.l.b16 %v525
        %v937 = vunpack.c.h.b16 %v525
        %v938 = vunpack.c.l.b16 %v526
        %v939 = vunpack.c.h.b16 %v526
        %v940 = vunpack.c.l.b16 %v527
        %v941 = vunpack.c.h.b16 %v527
        %v942 = vpack.c.b16 %v690, %v686
        %v943 = vpack.c.b16 %v691, %v687
        %v944 = vpack.c.b16 %v692, %v688
        %v945 = vpack.c.b16 %v693, %v689
        %v946 = vpack.c.b16 %v698, %v694
        %v947 = vpack.c.b16 %v699, %v695
        %v948 = vpack.c.b16 %v700, %v696
        %v949 = vpack.c.b16 %v701, %v697
        %v950 = vpack.c.b16 %v706, %v702
        %v951 = vpack.c.b16 %v707, %v703
        %v952 = vpack.c.b16 %v708, %v704
        %v953 = vpack.c.b16 %v709, %v705
        %v954 = vpack.c.b16 %v714, %v710
        %v955 = vpack.c.b16 %v715, %v711
        %v956 = vpack.c.b16 %v716, %v712
        %v957 = vpack.c.b16 %v717, %v713
        %v958 = vpack.c.b16 %v722, %v718
        %v959 = vpack.c.b16 %v723, %v719
        %v960 = vpack.c.b16 %v724, %v720
        %v961 = vpack.c.b16 %v725, %v721
        %v962 = vpack.c.b16 %v730, %v726
        %v963 = vpack.c.b16 %v731, %v727
        %v964 = vpack.c.b16 %v732, %v728
        %v965 = vpack.c.b16 %v733, %v729
        %v966 = vpack.c.b16 %v738, %v734
        %v967 = vpack.c.b16 %v739, %v735
        %v968 = vpack.c.b16 %v740, %v736
        %v969 = vpack.c.b16 %v741, %v737
        %v970 = vpack.c.b16 %v746, %v742
        %v971 = vpack.c.b16 %v747, %v743
        %v972 = vpack.c.b16 %v748, %v744
        %v973 = vpack.c.b16 %v749, %v745
        %v974 = vpack.c.b16 %v754, %v750
        %v975 = vpack.c.b16 %v755, %v751
        %v976 = vpack.c.b16 %v756, %v752
        %v977 = vpack.c.b16 %v757, %v753
        %v978 = vpack.c.b16 %v762, %v758
        %v979 = vpack.c.b16 %v763, %v759
        %v980 = vpack.c.b16 %v764, %v760
        %v981 = vpack.c.b16 %v765, %v761
        %v982 = vpack.c.b16 %v770, %v766
        %v983 = vpack.c.b16 %v771, %v767
        %v984 = vpack.c.b16 %v772, %v768
        %v985 = vpack.c.b16 %v773, %v769
        %v986 = vpack.c.b16 %v778, %v774
        %v987 = vpack.c.b16 %v779, %v775
        %v988 = vpack.c.b16 %v780, %v776
        %v989 = vpack.c.b16 %v781, %v777
        %v990 = vpack.c.b16 %v786, %v782
        %v991 = vpack.c.b16 %v787, %v783
        %v992 = vpack.c.b16 %v788, %v784
        %v993 = vpack.c.b16 %v789, %v785
        %v994 = vpack.c.b16 %v794, %v790
        %v995 = vpack.c.b16 %v795, %v791
        %v996 = vpack.c.b16 %v796, %v792
        %v997 = vpack.c.b16 %v797, %v793
        %v998 = vpack.c.b16 %v802, %v798
        %v999 = vpack.c.b16 %v803, %v799
        %v1000 = vpack.c.b16 %v804, %v800
        %v1001 = vpack.c.b16 %v805, %v801
        %v1002 = vpack.c.b16 %v810, %v806
        %v1003 = vpack.c.b16 %v811, %v807
        %v1004 = vpack.c.b16 %v812, %v808
        %v1005 = vpack.c.b16 %v813, %v809
        %v1006 = vpack.c.b16 %v818, %v814
        %v1007 = vpack.c.b16 %v819, %v815
        %v1008 = vpack.c.b16 %v820, %v816
        %v1009 = vpack.c.b16 %v821, %v817
        %v1010 = vpack.c.b16 %v826, %v822
        %v1011 = vpack.c.b16 %v827, %v823
        %v1012 = vpack.c.b16 %v828, %v824
        %v1013 = vpack.c.b16 %v829, %v825
        %v1014 = vpack.c.b16 %v834, %v830
        %v1015 = vpack.c.b16 %v835, %v831
        %v1016 = vpack.c.b16 %v836, %v832
        %v1017 = vpack.c.b16 %v837, %v833
        %v1018 = vpack.c.b16 %v842, %v838
        %v1019 = vpack.c.b16 %v843, %v839
        %v1020 = vpack.c.b16 %v844, %v840
        %v1021 = vpack.c.b16 %v845, %v841
        %v1022 = vpack.c.b16 %v850, %v846
        %v1023 = vpack.c.b16 %v851, %v847
        %v1024 = vpack.c.b16 %v852, %v848
        %v1025 = vpack.c.b16 %v853, %v849
        %v1026 = vpack.c.b16 %v858, %v854
        %v1027 = vpack.c.b16 %v859, %v855
        %v1028 = vpack.c.b16 %v860, %v856
        %v1029 = vpack.c.b16 %v861, %v857
        %v1030 = vpack.c.b16 %v866, %v862
        %v1031 = vpack.c.b16 %v867, %v863
        %v1032 = vpack.c.b16 %v868, %v864
        %v1033 = vpack.c.b16 %v869, %v865
        %v1034 = vpack.c.b16 %v874, %v870
        %v1035 = vpack.c.b16 %v875, %v871
        %v1036 = vpack.c.b16 %v876, %v872
        %v1037 = vpack.c.b16 %v877, %v873
        %v1038 = vpack.c.b16 %v882, %v878
        %v1039 = vpack.c.b16 %v883, %v879
        %v1040 = vpack.c.b16 %v884, %v880
        %v1041 = vpack.c.b16 %v885, %v881
        %v1042 = vpack.c.b16 %v890, %v886
        %v1043 = vpack.c.b16 %v891, %v887
        %v1044 = vpack.c.b16 %v892, %v888
        %v1045 = vpack.c.b16 %v893, %v889
        %v1046 = vpack.c.b16 %v898, %v894
        %v1047 = vpack.c.b16 %v899, %v895
        %v1048 = vpack.c.b16 %v900, %v896
        %v1049 = vpack.c.b16 %v901, %v897
        %v1050 = vpack.c.b16 %v906, %v902
        %v1051 = vpack.c.b16 %v907, %v903
        %v1052 = vpack.c.b16 %v908, %v904
        %v1053 = vpack.c.b16 %v909, %v905
        %v1054 = vpack.c.b16 %v914, %v910
        %v1055 = vpack.c.b16 %v915, %v911
        %v1056 = vpack.c.b16 %v916, %v912
        %v1057 = vpack.c.b16 %v917, %v913
        %v1058 = vpack.c.b16 %v922, %v918
        %v1059 = vpack.c.b16 %v923, %v919
        %v1060 = vpack.c.b16 %v924, %v920
        %v1061 = vpack.c.b16 %v925, %v921
        %v1062 = vpack.c.b16 %v930, %v926
        %v1063 = vpack.c.b16 %v931, %v927
        %v1064 = vpack.c.b16 %v932, %v928
        %v1065 = vpack.c.b16 %v933, %v929
        %v1066 = vpack.c.b16 %v938, %v934
        %v1067 = vpack.c.b16 %v939, %v935
        %v1068 = vpack.c.b16 %v940, %v936
        %v1069 = vpack.c.b16 %v941, %v937
        %1198 = vmatpush.bf16.msra.mxu0 %v970
        %1199 = vmatpush.bf16.msra.mxu0 %v966
        %1200 = vmatpush.bf16.msra.mxu0 %v962
        %1201 = vmatpush.bf16.msra.mxu0 %v958
        %1202 = vmatpush.bf16.msra.mxu0 %v954
        %1203 = vmatpush.bf16.msra.mxu0 %v950
        %1204 = vmatpush.bf16.msra.mxu0 %v946
        %1205 = vmatpush.bf16.msra.mxu0 %v942
        %1206 = vmatmul.bf16.gmra.mxu0 %v550
        %v1207 = vpop.f32.mrf.mxu0
        %v1208 = vadd.f32 %v530, %v1207
        %v1209 = vpop.f32.mrf.mxu0
        %v1210 = vadd.f32 %v530, %v1209
        %1211 = vdwg.mxu0
        %1212 = vmatpush.bf16.msra.mxu0 %v1002
        %1213 = vmatpush.bf16.msra.mxu0 %v998
        %1214 = vmatpush.bf16.msra.mxu0 %v994
        %1215 = vmatpush.bf16.msra.mxu0 %v990
        %1216 = vmatpush.bf16.msra.mxu0 %v986
        %1217 = vmatpush.bf16.msra.mxu0 %v982
        %1218 = vmatpush.bf16.msra.mxu0 %v978
        %1219 = vmatpush.bf16.msra.mxu0 %v974
        %1220 = vmatmul.bf16.gmra.mxu0 %v551
        %v1221 = vpop.f32.mrf.mxu0
        %v1222 = vadd.f32 %v1208, %v1221
        %v1223 = vpop.f32.mrf.mxu0
        %v1224 = vadd.f32 %v1210, %v1223
        %1225 = vdwg.mxu0
        %1226 = vmatpush.bf16.msra.mxu0 %v1034
        %1227 = vmatpush.bf16.msra.mxu0 %v1030
        %1228 = vmatpush.bf16.msra.mxu0 %v1026
        %1229 = vmatpush.bf16.msra.mxu0 %v1022
        %1230 = vmatpush.bf16.msra.mxu0 %v1018
        %1231 = vmatpush.bf16.msra.mxu0 %v1014
        %1232 = vmatpush.bf16.msra.mxu0 %v1010
        %1233 = vmatpush.bf16.msra.mxu0 %v1006
        %1234 = vmatmul.bf16.gmra.mxu0 %v552
        %v1235 = vpop.f32.mrf.mxu0
        %v1236 = vadd.f32 %v1222, %v1235
        %v1237 = vpop.f32.mrf.mxu0
        %v1238 = vadd.f32 %v1224, %v1237
        %1239 = vdwg.mxu0
        %1240 = vmatpush.bf16.msra.mxu0 %v1066
        %1241 = vmatpush.bf16.msra.mxu0 %v1062
        %1242 = vmatpush.bf16.msra.mxu0 %v1058
        %1243 = vmatpush.bf16.msra.mxu0 %v1054
        %1244 = vmatpush.bf16.msra.mxu0 %v1050
        %1245 = vmatpush.bf16.msra.mxu0 %v1046
        %1246 = vmatpush.bf16.msra.mxu0 %v1042
        %1247 = vmatpush.bf16.msra.mxu0 %v1038
        %1248 = vmatmul.bf16.gmra.mxu0 %v553
        %v1249 = vpop.f32.mrf.mxu0
        %v1250 = vadd.f32 %v1236, %v1249
        %v1251 = vpop.f32.mrf.mxu0
        %v1252 = vadd.f32 %v1238, %v1251
        %1253 = vdwg.mxu0
        %1254 = vmatpush.bf16.msra.mxu0 %v971
        %1255 = vmatpush.bf16.msra.mxu0 %v967
        %1256 = vmatpush.bf16.msra.mxu0 %v963
        %1257 = vmatpush.bf16.msra.mxu0 %v959
        %1258 = vmatpush.bf16.msra.mxu0 %v955
        %1259 = vmatpush.bf16.msra.mxu0 %v951
        %1260 = vmatpush.bf16.msra.mxu0 %v947
        %1261 = vmatpush.bf16.msra.mxu0 %v943
        %1262 = vmatmul.bf16.gmra.mxu0 %v550
        %v1263 = vpop.f32.mrf.mxu0
        %v1264 = vadd.f32 %v531, %v1263
        %v1265 = vpop.f32.mrf.mxu0
        %v1266 = vadd.f32 %v531, %v1265
        %1267 = vdwg.mxu0
        %1268 = vmatpush.bf16.msra.mxu0 %v1003
        %1269 = vmatpush.bf16.msra.mxu0 %v999
        %1270 = vmatpush.bf16.msra.mxu0 %v995
        %1271 = vmatpush.bf16.msra.mxu0 %v991
        %1272 = vmatpush.bf16.msra.mxu0 %v987
        %1273 = vmatpush.bf16.msra.mxu0 %v983
        %1274 = vmatpush.bf16.msra.mxu0 %v979
        %1275 = vmatpush.bf16.msra.mxu0 %v975
        %1276 = vmatmul.bf16.gmra.mxu0 %v551
        %v1277 = vpop.f32.mrf.mxu0
        %v1278 = vadd.f32 %v1264, %v1277
        %v1279 = vpop.f32.mrf.mxu0
        %v1280 = vadd.f32 %v1266, %v1279
        %1281 = vdwg.mxu0
        %1282 = vmatpush.bf16.msra.mxu0 %v1035
        %1283 = vmatpush.bf16.msra.mxu0 %v1031
        %1284 = vmatpush.bf16.msra.mxu0 %v1027
        %1285 = vmatpush.bf16.msra.mxu0 %v1023
        %1286 = vmatpush.bf16.msra.mxu0 %v1019
        %1287 = vmatpush.bf16.msra.mxu0 %v1015
        %1288 = vmatpush.bf16.msra.mxu0 %v1011
        %1289 = vmatpush.bf16.msra.mxu0 %v1007
        %1290 = vmatmul.bf16.gmra.mxu0 %v552
        %v1291 = vpop.f32.mrf.mxu0
        %v1292 = vadd.f32 %v1278, %v1291
        %v1293 = vpop.f32.mrf.mxu0
        %v1294 = vadd.f32 %v1280, %v1293
        %1295 = vdwg.mxu0
        %1296 = vmatpush.bf16.msra.mxu0 %v1067
        %1297 = vmatpush.bf16.msra.mxu0 %v1063
        %1298 = vmatpush.bf16.msra.mxu0 %v1059
        %1299 = vmatpush.bf16.msra.mxu0 %v1055
        %1300 = vmatpush.bf16.msra.mxu0 %v1051
        %1301 = vmatpush.bf16.msra.mxu0 %v1047
        %1302 = vmatpush.bf16.msra.mxu0 %v1043
        %1303 = vmatpush.bf16.msra.mxu0 %v1039
        %1304 = vmatmul.bf16.gmra.mxu0 %v553
        %v1305 = vpop.f32.mrf.mxu0
        %v1306 = vadd.f32 %v1292, %v1305
        %v1307 = vpop.f32.mrf.mxu0
        %v1308 = vadd.f32 %v1294, %v1307
        %1309 = vdwg.mxu0
        %1310 = vmatpush.bf16.msra.mxu0 %v972
        %1311 = vmatpush.bf16.msra.mxu0 %v968
        %1312 = vmatpush.bf16.msra.mxu0 %v964
        %1313 = vmatpush.bf16.msra.mxu0 %v960
        %1314 = vmatpush.bf16.msra.mxu0 %v956
        %1315 = vmatpush.bf16.msra.mxu0 %v952
        %1316 = vmatpush.bf16.msra.mxu0 %v948
        %1317 = vmatpush.bf16.msra.mxu0 %v944
        %1318 = vmatmul.bf16.gmra.mxu0 %v550
        %v1319 = vpop.f32.mrf.mxu0
        %v1320 = vadd.f32 %v532, %v1319
        %v1321 = vpop.f32.mrf.mxu0
        %v1322 = vadd.f32 %v532, %v1321
        %1323 = vdwg.mxu0
        %1324 = vmatpush.bf16.msra.mxu0 %v1004
        %1325 = vmatpush.bf16.msra.mxu0 %v1000
        %1326 = vmatpush.bf16.msra.mxu0 %v996
        %1327 = vmatpush.bf16.msra.mxu0 %v992
        %1328 = vmatpush.bf16.msra.mxu0 %v988
        %1329 = vmatpush.bf16.msra.mxu0 %v984
        %1330 = vmatpush.bf16.msra.mxu0 %v980
        %1331 = vmatpush.bf16.msra.mxu0 %v976
        %1332 = vmatmul.bf16.gmra.mxu0 %v551
        %v1333 = vpop.f32.mrf.mxu0
        %v1334 = vadd.f32 %v1320, %v1333
        %v1335 = vpop.f32.mrf.mxu0
        %v1336 = vadd.f32 %v1322, %v1335
        %1337 = vdwg.mxu0
        %1338 = vmatpush.bf16.msra.mxu0 %v1036
        %1339 = vmatpush.bf16.msra.mxu0 %v1032
        %1340 = vmatpush.bf16.msra.mxu0 %v1028
        %1341 = vmatpush.bf16.msra.mxu0 %v1024
        %1342 = vmatpush.bf16.msra.mxu0 %v1020
        %1343 = vmatpush.bf16.msra.mxu0 %v1016
        %1344 = vmatpush.bf16.msra.mxu0 %v1012
        %1345 = vmatpush.bf16.msra.mxu0 %v1008
        %1346 = vmatmul.bf16.gmra.mxu0 %v552
        %v1347 = vpop.f32.mrf.mxu0
        %v1348 = vadd.f32 %v1334, %v1347
        %v1349 = vpop.f32.mrf.mxu0
        %v1350 = vadd.f32 %v1336, %v1349
        %1351 = vdwg.mxu0
        %1352 = vmatpush.bf16.msra.mxu0 %v1068
        %1353 = vmatpush.bf16.msra.mxu0 %v1064
        %1354 = vmatpush.bf16.msra.mxu0 %v1060
        %1355 = vmatpush.bf16.msra.mxu0 %v1056
        %1356 = vmatpush.bf16.msra.mxu0 %v1052
        %1357 = vmatpush.bf16.msra.mxu0 %v1048
        %1358 = vmatpush.bf16.msra.mxu0 %v1044
        %1359 = vmatpush.bf16.msra.mxu0 %v1040
        %1360 = vmatmul.bf16.gmra.mxu0 %v553
        %v1361 = vpop.f32.mrf.mxu0
        %v1362 = vadd.f32 %v1348, %v1361
        %v1363 = vpop.f32.mrf.mxu0
        %v1364 = vadd.f32 %v1350, %v1363
        %1365 = vdwg.mxu0
        %1366 = vmatpush.bf16.msra.mxu0 %v973
        %1367 = vmatpush.bf16.msra.mxu0 %v969
        %1368 = vmatpush.bf16.msra.mxu0 %v965
        %1369 = vmatpush.bf16.msra.mxu0 %v961
        %1370 = vmatpush.bf16.msra.mxu0 %v957
        %1371 = vmatpush.bf16.msra.mxu0 %v953
        %1372 = vmatpush.bf16.msra.mxu0 %v949
        %1373 = vmatpush.bf16.msra.mxu0 %v945
        %1374 = vmatmul.bf16.gmra.mxu0 %v550
        %v1375 = vpop.f32.mrf.mxu0
        %v1376 = vadd.f32 %v533, %v1375
        %v1377 = vpop.f32.mrf.mxu0
        %v1378 = vadd.f32 %v533, %v1377
        %1379 = vdwg.mxu0
        %1380 = vmatpush.bf16.msra.mxu0 %v1005
        %1381 = vmatpush.bf16.msra.mxu0 %v1001
        %1382 = vmatpush.bf16.msra.mxu0 %v997
        %1383 = vmatpush.bf16.msra.mxu0 %v993
        %1384 = vmatpush.bf16.msra.mxu0 %v989
        %1385 = vmatpush.bf16.msra.mxu0 %v985
        %1386 = vmatpush.bf16.msra.mxu0 %v981
        %1387 = vmatpush.bf16.msra.mxu0 %v977
        %1388 = vmatmul.bf16.gmra.mxu0 %v551
        %v1389 = vpop.f32.mrf.mxu0
        %v1390 = vadd.f32 %v1376, %v1389
        %v1391 = vpop.f32.mrf.mxu0
        %v1392 = vadd.f32 %v1378, %v1391
        %1393 = vdwg.mxu0
        %1394 = vmatpush.bf16.msra.mxu0 %v1037
        %1395 = vmatpush.bf16.msra.mxu0 %v1033
        %1396 = vmatpush.bf16.msra.mxu0 %v1029
        %1397 = vmatpush.bf16.msra.mxu0 %v1025
        %1398 = vmatpush.bf16.msra.mxu0 %v1021
        %1399 = vmatpush.bf16.msra.mxu0 %v1017
        %1400 = vmatpush.bf16.msra.mxu0 %v1013
        %1401 = vmatpush.bf16.msra.mxu0 %v1009
        %1402 = vmatmul.bf16.gmra.mxu0 %v552
        %v1403 = vpop.f32.mrf.mxu0
        %v1404 = vadd.f32 %v1390, %v1403
        %v1405 = vpop.f32.mrf.mxu0
        %v1406 = vadd.f32 %v1392, %v1405
        %1407 = vdwg.mxu0
        %1408 = vmatpush.bf16.msra.mxu0 %v1069
        %1409 = vmatpush.bf16.msra.mxu0 %v1065
        %1410 = vmatpush.bf16.msra.mxu0 %v1061
        %1411 = vmatpush.bf16.msra.mxu0 %v1057
        %1412 = vmatpush.bf16.msra.mxu0 %v1053
        %1413 = vmatpush.bf16.msra.mxu0 %v1049
        %1414 = vmatpush.bf16.msra.mxu0 %v1045
        %1415 = vmatpush.bf16.msra.mxu0 %v1041
        %1416 = vmatmul.bf16.gmra.mxu0 %v553
        %v1417 = vpop.f32.mrf.mxu0
        %v1418 = vadd.f32 %v1404, %v1417
        %v1419 = vpop.f32.mrf.mxu0
        %v1420 = vadd.f32 %v1406, %v1419
        %1421 = vdwg.mxu0
        %v1422 = vmax.f32 %v1250, 0.0
        %v1423 = vmax.f32 %v1306, 0.0
        %v1424 = vmax.f32 %v1362, 0.0
        %v1425 = vmax.f32 %v1418, 0.0
        %v1426 = vmax.f32 %v1252, 0.0
        %v1427 = vmax.f32 %v1308, 0.0
        %v1428 = vmax.f32 %v1364, 0.0
        %v1429 = vmax.f32 %v1420, 0.0
        %v1430 = vld [vmem:[#allocation2] sm:$0xff]
        %v1431 = vld [vmem:[#allocation2 + $0x8] sm:$0xff]
        %v1432 = vld [vmem:[#allocation2 + $0x10] sm:$0xff]
        %v1433 = vld [vmem:[#allocation2 + $0x18] sm:$0xff]
        %v1434 = vld [vmem:[#allocation2 + $0x20] sm:$0xff]
        %v1435 = vld [vmem:[#allocation2 + $0x28] sm:$0xff]
        %v1436 = vld [vmem:[#allocation2 + $0x30] sm:$0xff]
        %v1437 = vld [vmem:[#allocation2 + $0x38] sm:$0xff]
        %v1438 = vpack.c.bf16 %v1426, %v1422
        %v1439 = vpack.c.bf16 %v1427, %v1423
        %v1440 = vpack.c.bf16 %v1428, %v1424
        %v1441 = vpack.c.bf16 %v1429, %v1425
        %v1442 = vld [vmem:[%s331] sm:$0xff]
        %v1443 = vld [vmem:[%s331 + $0x8] sm:$0xff]
        %v1444 = vld [vmem:[%s331 + $0x10] sm:$0xff]
        %v1445 = vld [vmem:[%s331 + $0x18] sm:$0xff]
        %v1446 = vld [vmem:[%s331 + $0x20] sm:$0xff]
        %v1447 = vld [vmem:[%s331 + $0x28] sm:$0xff]
        %v1448 = vld [vmem:[%s331 + $0x30] sm:$0xff]
        %v1449 = vld [vmem:[%s331 + $0x38] sm:$0xff]
        %v1450 = vld [vmem:[%s331 + $0x40] sm:$0xff]
        %v1451 = vld [vmem:[%s331 + $0x48] sm:$0xff]
        %v1452 = vld [vmem:[%s331 + $0x50] sm:$0xff]
        %v1453 = vld [vmem:[%s331 + $0x58] sm:$0xff]
        %v1454 = vld [vmem:[%s331 + $0x60] sm:$0xff]
        %v1455 = vld [vmem:[%s331 + $0x68] sm:$0xff]
        %v1456 = vld [vmem:[%s331 + $0x70] sm:$0xff]
        %v1457 = vld [vmem:[%s331 + $0x78] sm:$0xff]
        %v1458 = vld [vmem:[%s331 + $0x80] sm:$0xff]
        %v1459 = vld [vmem:[%s331 + $0x88] sm:$0xff]
        %v1460 = vld [vmem:[%s331 + $0x90] sm:$0xff]
        %v1461 = vld [vmem:[%s331 + $0x98] sm:$0xff]
        %v1462 = vld [vmem:[%s331 + $0xa0] sm:$0xff]
        %v1463 = vld [vmem:[%s331 + $0xa8] sm:$0xff]
        %v1464 = vld [vmem:[%s331 + $0xb0] sm:$0xff]
        %v1465 = vld [vmem:[%s331 + $0xb8] sm:$0xff]
        %v1466 = vld [vmem:[%s331 + $0xc0] sm:$0xff]
        %v1467 = vld [vmem:[%s331 + $0xc8] sm:$0xff]
        %v1468 = vld [vmem:[%s331 + $0xd0] sm:$0xff]
        %v1469 = vld [vmem:[%s331 + $0xd8] sm:$0xff]
        %v1470 = vld [vmem:[%s331 + $0xe0] sm:$0xff]
        %v1471 = vld [vmem:[%s331 + $0xe8] sm:$0xff]
        %v1472 = vld [vmem:[%s331 + $0xf0] sm:$0xff]
        %v1473 = vld [vmem:[%s331 + $0xf8] sm:$0xff]
        %v1474 = vld [vmem:[%s331 + $0x100] sm:$0xff]
        %v1475 = vld [vmem:[%s331 + $0x108] sm:$0xff]
        %v1476 = vld [vmem:[%s331 + $0x110] sm:$0xff]
        %v1477 = vld [vmem:[%s331 + $0x118] sm:$0xff]
        %v1478 = vld [vmem:[%s331 + $0x120] sm:$0xff]
        %v1479 = vld [vmem:[%s331 + $0x128] sm:$0xff]
        %v1480 = vld [vmem:[%s331 + $0x130] sm:$0xff]
        %v1481 = vld [vmem:[%s331 + $0x138] sm:$0xff]
        %v1482 = vld [vmem:[%s331 + $0x140] sm:$0xff]
        %v1483 = vld [vmem:[%s331 + $0x148] sm:$0xff]
        %v1484 = vld [vmem:[%s331 + $0x150] sm:$0xff]
        %v1485 = vld [vmem:[%s331 + $0x158] sm:$0xff]
        %v1486 = vld [vmem:[%s331 + $0x160] sm:$0xff]
        %v1487 = vld [vmem:[%s331 + $0x168] sm:$0xff]
        %v1488 = vld [vmem:[%s331 + $0x170] sm:$0xff]
        %v1489 = vld [vmem:[%s331 + $0x178] sm:$0xff]
        %v1490 = vld [vmem:[%s331 + $0x180] sm:$0xff]
        %v1491 = vld [vmem:[%s331 + $0x188] sm:$0xff]
        %v1492 = vld [vmem:[%s331 + $0x190] sm:$0xff]
        %v1493 = vld [vmem:[%s331 + $0x198] sm:$0xff]
        %v1494 = vld [vmem:[%s331 + $0x1a0] sm:$0xff]
        %v1495 = vld [vmem:[%s331 + $0x1a8] sm:$0xff]
        %v1496 = vld [vmem:[%s331 + $0x1b0] sm:$0xff]
        %v1497 = vld [vmem:[%s331 + $0x1b8] sm:$0xff]
        %v1498 = vld [vmem:[%s331 + $0x1c0] sm:$0xff]
        %v1499 = vld [vmem:[%s331 + $0x1c8] sm:$0xff]
        %v1500 = vld [vmem:[%s331 + $0x1d0] sm:$0xff]
        %v1501 = vld [vmem:[%s331 + $0x1d8] sm:$0xff]
        %v1502 = vld [vmem:[%s331 + $0x1e0] sm:$0xff]
        %v1503 = vld [vmem:[%s331 + $0x1e8] sm:$0xff]
        %v1504 = vld [vmem:[%s331 + $0x1f0] sm:$0xff]
        %v1505 = vld [vmem:[%s331 + $0x1f8] sm:$0xff]
        %v1506 = vld [vmem:[%s331 + $0x200] sm:$0xff]
        %v1507 = vld [vmem:[%s331 + $0x208] sm:$0xff]
        %v1508 = vld [vmem:[%s331 + $0x210] sm:$0xff]
        %v1509 = vld [vmem:[%s331 + $0x218] sm:$0xff]
        %v1510 = vld [vmem:[%s331 + $0x220] sm:$0xff]
        %v1511 = vld [vmem:[%s331 + $0x228] sm:$0xff]
        %v1512 = vld [vmem:[%s331 + $0x230] sm:$0xff]
        %v1513 = vld [vmem:[%s331 + $0x238] sm:$0xff]
        %v1514 = vld [vmem:[%s331 + $0x240] sm:$0xff]
        %v1515 = vld [vmem:[%s331 + $0x248] sm:$0xff]
        %v1516 = vld [vmem:[%s331 + $0x250] sm:$0xff]
        %v1517 = vld [vmem:[%s331 + $0x258] sm:$0xff]
        %v1518 = vld [vmem:[%s331 + $0x260] sm:$0xff]
        %v1519 = vld [vmem:[%s331 + $0x268] sm:$0xff]
        %v1520 = vld [vmem:[%s331 + $0x270] sm:$0xff]
        %v1521 = vld [vmem:[%s331 + $0x278] sm:$0xff]
        %v1522 = vld [vmem:[%s331 + $0x280] sm:$0xff]
        %v1523 = vld [vmem:[%s331 + $0x288] sm:$0xff]
        %v1524 = vld [vmem:[%s331 + $0x290] sm:$0xff]
        %v1525 = vld [vmem:[%s331 + $0x298] sm:$0xff]
        %v1526 = vld [vmem:[%s331 + $0x2a0] sm:$0xff]
        %v1527 = vld [vmem:[%s331 + $0x2a8] sm:$0xff]
        %v1528 = vld [vmem:[%s331 + $0x2b0] sm:$0xff]
        %v1529 = vld [vmem:[%s331 + $0x2b8] sm:$0xff]
        %v1530 = vld [vmem:[%s331 + $0x2c0] sm:$0xff]
        %v1531 = vld [vmem:[%s331 + $0x2c8] sm:$0xff]
        %v1532 = vld [vmem:[%s331 + $0x2d0] sm:$0xff]
        %v1533 = vld [vmem:[%s331 + $0x2d8] sm:$0xff]
        %v1534 = vld [vmem:[%s331 + $0x2e0] sm:$0xff]
        %v1535 = vld [vmem:[%s331 + $0x2e8] sm:$0xff]
        %v1536 = vld [vmem:[%s331 + $0x2f0] sm:$0xff]
        %v1537 = vld [vmem:[%s331 + $0x2f8] sm:$0xff]
        %v1538 = vld [vmem:[%s331 + $0x300] sm:$0xff]
        %v1539 = vld [vmem:[%s331 + $0x308] sm:$0xff]
        %v1540 = vld [vmem:[%s331 + $0x310] sm:$0xff]
        %v1541 = vld [vmem:[%s331 + $0x318] sm:$0xff]
        %v1542 = vld [vmem:[%s331 + $0x320] sm:$0xff]
        %v1543 = vld [vmem:[%s331 + $0x328] sm:$0xff]
        %v1544 = vld [vmem:[%s331 + $0x330] sm:$0xff]
        %v1545 = vld [vmem:[%s331 + $0x338] sm:$0xff]
        %v1546 = vld [vmem:[%s331 + $0x340] sm:$0xff]
        %v1547 = vld [vmem:[%s331 + $0x348] sm:$0xff]
        %v1548 = vld [vmem:[%s331 + $0x350] sm:$0xff]
        %v1549 = vld [vmem:[%s331 + $0x358] sm:$0xff]
        %v1550 = vld [vmem:[%s331 + $0x360] sm:$0xff]
        %v1551 = vld [vmem:[%s331 + $0x368] sm:$0xff]
        %v1552 = vld [vmem:[%s331 + $0x370] sm:$0xff]
        %v1553 = vld [vmem:[%s331 + $0x378] sm:$0xff]
        %v1554 = vld [vmem:[%s331 + $0x380] sm:$0xff]
        %v1555 = vld [vmem:[%s331 + $0x388] sm:$0xff]
        %v1556 = vld [vmem:[%s331 + $0x390] sm:$0xff]
        %v1557 = vld [vmem:[%s331 + $0x398] sm:$0xff]
        %v1558 = vld [vmem:[%s331 + $0x3a0] sm:$0xff]
        %v1559 = vld [vmem:[%s331 + $0x3a8] sm:$0xff]
        %v1560 = vld [vmem:[%s331 + $0x3b0] sm:$0xff]
        %v1561 = vld [vmem:[%s331 + $0x3b8] sm:$0xff]
        %v1562 = vld [vmem:[%s331 + $0x3c0] sm:$0xff]
        %v1563 = vld [vmem:[%s331 + $0x3c8] sm:$0xff]
        %v1564 = vld [vmem:[%s331 + $0x3d0] sm:$0xff]
        %v1565 = vld [vmem:[%s331 + $0x3d8] sm:$0xff]
        %v1566 = vld [vmem:[%s331 + $0x3e0] sm:$0xff]
        %v1567 = vld [vmem:[%s331 + $0x3e8] sm:$0xff]
        %v1568 = vld [vmem:[%s331 + $0x3f0] sm:$0xff]
        %v1569 = vld [vmem:[%s331 + $0x3f8] sm:$0xff]
        %v1698 = vunpack.c.l.b16 %v1442
        %v1699 = vunpack.c.h.b16 %v1442
        %v1700 = vunpack.c.l.b16 %v1443
        %v1701 = vunpack.c.h.b16 %v1443
        %v1702 = vunpack.c.l.b16 %v1444
        %v1703 = vunpack.c.h.b16 %v1444
        %v1704 = vunpack.c.l.b16 %v1445
        %v1705 = vunpack.c.h.b16 %v1445
        %v1706 = vunpack.c.l.b16 %v1446
        %v1707 = vunpack.c.h.b16 %v1446
        %v1708 = vunpack.c.l.b16 %v1447
        %v1709 = vunpack.c.h.b16 %v1447
        %v1710 = vunpack.c.l.b16 %v1448
        %v1711 = vunpack.c.h.b16 %v1448
        %v1712 = vunpack.c.l.b16 %v1449
        %v1713 = vunpack.c.h.b16 %v1449
        %v1714 = vunpack.c.l.b16 %v1450
        %v1715 = vunpack.c.h.b16 %v1450
        %v1716 = vunpack.c.l.b16 %v1451
        %v1717 = vunpack.c.h.b16 %v1451
        %v1718 = vunpack.c.l.b16 %v1452
        %v1719 = vunpack.c.h.b16 %v1452
        %v1720 = vunpack.c.l.b16 %v1453
        %v1721 = vunpack.c.h.b16 %v1453
        %v1722 = vunpack.c.l.b16 %v1454
        %v1723 = vunpack.c.h.b16 %v1454
        %v1724 = vunpack.c.l.b16 %v1455
        %v1725 = vunpack.c.h.b16 %v1455
        %v1726 = vunpack.c.l.b16 %v1456
        %v1727 = vunpack.c.h.b16 %v1456
        %v1728 = vunpack.c.l.b16 %v1457
        %v1729 = vunpack.c.h.b16 %v1457
        %v1730 = vunpack.c.l.b16 %v1458
        %v1731 = vunpack.c.h.b16 %v1458
        %v1732 = vunpack.c.l.b16 %v1459
        %v1733 = vunpack.c.h.b16 %v1459
        %v1734 = vunpack.c.l.b16 %v1460
        %v1735 = vunpack.c.h.b16 %v1460
        %v1736 = vunpack.c.l.b16 %v1461
        %v1737 = vunpack.c.h.b16 %v1461
        %v1738 = vunpack.c.l.b16 %v1462
        %v1739 = vunpack.c.h.b16 %v1462
        %v1740 = vunpack.c.l.b16 %v1463
        %v1741 = vunpack.c.h.b16 %v1463
        %v1742 = vunpack.c.l.b16 %v1464
        %v1743 = vunpack.c.h.b16 %v1464
        %v1744 = vunpack.c.l.b16 %v1465
        %v1745 = vunpack.c.h.b16 %v1465
        %v1746 = vunpack.c.l.b16 %v1466
        %v1747 = vunpack.c.h.b16 %v1466
        %v1748 = vunpack.c.l.b16 %v1467
        %v1749 = vunpack.c.h.b16 %v1467
        %v1750 = vunpack.c.l.b16 %v1468
        %v1751 = vunpack.c.h.b16 %v1468
        %v1752 = vunpack.c.l.b16 %v1469
        %v1753 = vunpack.c.h.b16 %v1469
        %v1754 = vunpack.c.l.b16 %v1470
        %v1755 = vunpack.c.h.b16 %v1470
        %v1756 = vunpack.c.l.b16 %v1471
        %v1757 = vunpack.c.h.b16 %v1471
        %v1758 = vunpack.c.l.b16 %v1472
        %v1759 = vunpack.c.h.b16 %v1472
        %v1760 = vunpack.c.l.b16 %v1473
        %v1761 = vunpack.c.h.b16 %v1473
        %v1762 = vunpack.c.l.b16 %v1474
        %v1763 = vunpack.c.h.b16 %v1474
        %v1764 = vunpack.c.l.b16 %v1475
        %v1765 = vunpack.c.h.b16 %v1475
        %v1766 = vunpack.c.l.b16 %v1476
        %v1767 = vunpack.c.h.b16 %v1476
        %v1768 = vunpack.c.l.b16 %v1477
        %v1769 = vunpack.c.h.b16 %v1477
        %v1770 = vunpack.c.l.b16 %v1478
        %v1771 = vunpack.c.h.b16 %v1478
        %v1772 = vunpack.c.l.b16 %v1479
        %v1773 = vunpack.c.h.b16 %v1479
        %v1774 = vunpack.c.l.b16 %v1480
        %v1775 = vunpack.c.h.b16 %v1480
        %v1776 = vunpack.c.l.b16 %v1481
        %v1777 = vunpack.c.h.b16 %v1481
        %v1778 = vunpack.c.l.b16 %v1482
        %v1779 = vunpack.c.h.b16 %v1482
        %v1780 = vunpack.c.l.b16 %v1483
        %v1781 = vunpack.c.h.b16 %v1483
        %v1782 = vunpack.c.l.b16 %v1484
        %v1783 = vunpack.c.h.b16 %v1484
        %v1784 = vunpack.c.l.b16 %v1485
        %v1785 = vunpack.c.h.b16 %v1485
        %v1786 = vunpack.c.l.b16 %v1486
        %v1787 = vunpack.c.h.b16 %v1486
        %v1788 = vunpack.c.l.b16 %v1487
        %v1789 = vunpack.c.h.b16 %v1487
        %v1790 = vunpack.c.l.b16 %v1488
        %v1791 = vunpack.c.h.b16 %v1488
        %v1792 = vunpack.c.l.b16 %v1489
        %v1793 = vunpack.c.h.b16 %v1489
        %v1794 = vunpack.c.l.b16 %v1490
        %v1795 = vunpack.c.h.b16 %v1490
        %v1796 = vunpack.c.l.b16 %v1491
        %v1797 = vunpack.c.h.b16 %v1491
        %v1798 = vunpack.c.l.b16 %v1492
        %v1799 = vunpack.c.h.b16 %v1492
        %v1800 = vunpack.c.l.b16 %v1493
        %v1801 = vunpack.c.h.b16 %v1493
        %v1802 = vunpack.c.l.b16 %v1494
        %v1803 = vunpack.c.h.b16 %v1494
        %v1804 = vunpack.c.l.b16 %v1495
        %v1805 = vunpack.c.h.b16 %v1495
        %v1806 = vunpack.c.l.b16 %v1496
        %v1807 = vunpack.c.h.b16 %v1496
        %v1808 = vunpack.c.l.b16 %v1497
        %v1809 = vunpack.c.h.b16 %v1497
        %v1810 = vunpack.c.l.b16 %v1498
        %v1811 = vunpack.c.h.b16 %v1498
        %v1812 = vunpack.c.l.b16 %v1499
        %v1813 = vunpack.c.h.b16 %v1499
        %v1814 = vunpack.c.l.b16 %v1500
        %v1815 = vunpack.c.h.b16 %v1500
        %v1816 = vunpack.c.l.b16 %v1501
        %v1817 = vunpack.c.h.b16 %v1501
        %v1818 = vunpack.c.l.b16 %v1502
        %v1819 = vunpack.c.h.b16 %v1502
        %v1820 = vunpack.c.l.b16 %v1503
        %v1821 = vunpack.c.h.b16 %v1503
        %v1822 = vunpack.c.l.b16 %v1504
        %v1823 = vunpack.c.h.b16 %v1504
        %v1824 = vunpack.c.l.b16 %v1505
        %v1825 = vunpack.c.h.b16 %v1505
        %v1826 = vunpack.c.l.b16 %v1506
        %v1827 = vunpack.c.h.b16 %v1506
        %v1828 = vunpack.c.l.b16 %v1507
        %v1829 = vunpack.c.h.b16 %v1507
        %v1830 = vunpack.c.l.b16 %v1508
        %v1831 = vunpack.c.h.b16 %v1508
        %v1832 = vunpack.c.l.b16 %v1509
        %v1833 = vunpack.c.h.b16 %v1509
        %v1834 = vunpack.c.l.b16 %v1510
        %v1835 = vunpack.c.h.b16 %v1510
        %v1836 = vunpack.c.l.b16 %v1511
        %v1837 = vunpack.c.h.b16 %v1511
        %v1838 = vunpack.c.l.b16 %v1512
        %v1839 = vunpack.c.h.b16 %v1512
        %v1840 = vunpack.c.l.b16 %v1513
        %v1841 = vunpack.c.h.b16 %v1513
        %v1842 = vunpack.c.l.b16 %v1514
        %v1843 = vunpack.c.h.b16 %v1514
        %v1844 = vunpack.c.l.b16 %v1515
        %v1845 = vunpack.c.h.b16 %v1515
        %v1846 = vunpack.c.l.b16 %v1516
        %v1847 = vunpack.c.h.b16 %v1516
        %v1848 = vunpack.c.l.b16 %v1517
        %v1849 = vunpack.c.h.b16 %v1517
        %v1850 = vunpack.c.l.b16 %v1518
        %v1851 = vunpack.c.h.b16 %v1518
        %v1852 = vunpack.c.l.b16 %v1519
        %v1853 = vunpack.c.h.b16 %v1519
        %v1854 = vunpack.c.l.b16 %v1520
        %v1855 = vunpack.c.h.b16 %v1520
        %v1856 = vunpack.c.l.b16 %v1521
        %v1857 = vunpack.c.h.b16 %v1521
        %v1858 = vunpack.c.l.b16 %v1522
        %v1859 = vunpack.c.h.b16 %v1522
        %v1860 = vunpack.c.l.b16 %v1523
        %v1861 = vunpack.c.h.b16 %v1523
        %v1862 = vunpack.c.l.b16 %v1524
        %v1863 = vunpack.c.h.b16 %v1524
        %v1864 = vunpack.c.l.b16 %v1525
        %v1865 = vunpack.c.h.b16 %v1525
        %v1866 = vunpack.c.l.b16 %v1526
        %v1867 = vunpack.c.h.b16 %v1526
        %v1868 = vunpack.c.l.b16 %v1527
        %v1869 = vunpack.c.h.b16 %v1527
        %v1870 = vunpack.c.l.b16 %v1528
        %v1871 = vunpack.c.h.b16 %v1528
        %v1872 = vunpack.c.l.b16 %v1529
        %v1873 = vunpack.c.h.b16 %v1529
        %v1874 = vunpack.c.l.b16 %v1530
        %v1875 = vunpack.c.h.b16 %v1530
        %v1876 = vunpack.c.l.b16 %v1531
        %v1877 = vunpack.c.h.b16 %v1531
        %v1878 = vunpack.c.l.b16 %v1532
        %v1879 = vunpack.c.h.b16 %v1532
        %v1880 = vunpack.c.l.b16 %v1533
        %v1881 = vunpack.c.h.b16 %v1533
        %v1882 = vunpack.c.l.b16 %v1534
        %v1883 = vunpack.c.h.b16 %v1534
        %v1884 = vunpack.c.l.b16 %v1535
        %v1885 = vunpack.c.h.b16 %v1535
        %v1886 = vunpack.c.l.b16 %v1536
        %v1887 = vunpack.c.h.b16 %v1536
        %v1888 = vunpack.c.l.b16 %v1537
        %v1889 = vunpack.c.h.b16 %v1537
        %v1890 = vunpack.c.l.b16 %v1538
        %v1891 = vunpack.c.h.b16 %v1538
        %v1892 = vunpack.c.l.b16 %v1539
        %v1893 = vunpack.c.h.b16 %v1539
        %v1894 = vunpack.c.l.b16 %v1540
        %v1895 = vunpack.c.h.b16 %v1540
        %v1896 = vunpack.c.l.b16 %v1541
        %v1897 = vunpack.c.h.b16 %v1541
        %v1898 = vunpack.c.l.b16 %v1542
        %v1899 = vunpack.c.h.b16 %v1542
        %v1900 = vunpack.c.l.b16 %v1543
        %v1901 = vunpack.c.h.b16 %v1543
        %v1902 = vunpack.c.l.b16 %v1544
        %v1903 = vunpack.c.h.b16 %v1544
        %v1904 = vunpack.c.l.b16 %v1545
        %v1905 = vunpack.c.h.b16 %v1545
        %v1906 = vunpack.c.l.b16 %v1546
        %v1907 = vunpack.c.h.b16 %v1546
        %v1908 = vunpack.c.l.b16 %v1547
        %v1909 = vunpack.c.h.b16 %v1547
        %v1910 = vunpack.c.l.b16 %v1548
        %v1911 = vunpack.c.h.b16 %v1548
        %v1912 = vunpack.c.l.b16 %v1549
        %v1913 = vunpack.c.h.b16 %v1549
        %v1914 = vunpack.c.l.b16 %v1550
        %v1915 = vunpack.c.h.b16 %v1550
        %v1916 = vunpack.c.l.b16 %v1551
        %v1917 = vunpack.c.h.b16 %v1551
        %v1918 = vunpack.c.l.b16 %v1552
        %v1919 = vunpack.c.h.b16 %v1552
        %v1920 = vunpack.c.l.b16 %v1553
        %v1921 = vunpack.c.h.b16 %v1553
        %v1922 = vunpack.c.l.b16 %v1554
        %v1923 = vunpack.c.h.b16 %v1554
        %v1924 = vunpack.c.l.b16 %v1555
        %v1925 = vunpack.c.h.b16 %v1555
        %v1926 = vunpack.c.l.b16 %v1556
        %v1927 = vunpack.c.h.b16 %v1556
        %v1928 = vunpack.c.l.b16 %v1557
        %v1929 = vunpack.c.h.b16 %v1557
        %v1930 = vunpack.c.l.b16 %v1558
        %v1931 = vunpack.c.h.b16 %v1558
        %v1932 = vunpack.c.l.b16 %v1559
        %v1933 = vunpack.c.h.b16 %v1559
        %v1934 = vunpack.c.l.b16 %v1560
        %v1935 = vunpack.c.h.b16 %v1560
        %v1936 = vunpack.c.l.b16 %v1561
        %v1937 = vunpack.c.h.b16 %v1561
        %v1938 = vunpack.c.l.b16 %v1562
        %v1939 = vunpack.c.h.b16 %v1562
        %v1940 = vunpack.c.l.b16 %v1563
        %v1941 = vunpack.c.h.b16 %v1563
        %v1942 = vunpack.c.l.b16 %v1564
        %v1943 = vunpack.c.h.b16 %v1564
        %v1944 = vunpack.c.l.b16 %v1565
        %v1945 = vunpack.c.h.b16 %v1565
        %v1946 = vunpack.c.l.b16 %v1566
        %v1947 = vunpack.c.h.b16 %v1566
        %v1948 = vunpack.c.l.b16 %v1567
        %v1949 = vunpack.c.h.b16 %v1567
        %v1950 = vunpack.c.l.b16 %v1568
        %v1951 = vunpack.c.h.b16 %v1568
        %v1952 = vunpack.c.l.b16 %v1569
        %v1953 = vunpack.c.h.b16 %v1569
        %v1954 = vpack.c.b16 %v1702, %v1698
        %v1955 = vpack.c.b16 %v1703, %v1699
        %v1956 = vpack.c.b16 %v1704, %v1700
        %v1957 = vpack.c.b16 %v1705, %v1701
        %v1958 = vpack.c.b16 %v1710, %v1706
        %v1959 = vpack.c.b16 %v1711, %v1707
        %v1960 = vpack.c.b16 %v1712, %v1708
        %v1961 = vpack.c.b16 %v1713, %v1709
        %v1962 = vpack.c.b16 %v1718, %v1714
        %v1963 = vpack.c.b16 %v1719, %v1715
        %v1964 = vpack.c.b16 %v1720, %v1716
        %v1965 = vpack.c.b16 %v1721, %v1717
        %v1966 = vpack.c.b16 %v1726, %v1722
        %v1967 = vpack.c.b16 %v1727, %v1723
        %v1968 = vpack.c.b16 %v1728, %v1724
        %v1969 = vpack.c.b16 %v1729, %v1725
        %v1970 = vpack.c.b16 %v1734, %v1730
        %v1971 = vpack.c.b16 %v1735, %v1731
        %v1972 = vpack.c.b16 %v1736, %v1732
        %v1973 = vpack.c.b16 %v1737, %v1733
        %v1974 = vpack.c.b16 %v1742, %v1738
        %v1975 = vpack.c.b16 %v1743, %v1739
        %v1976 = vpack.c.b16 %v1744, %v1740
        %v1977 = vpack.c.b16 %v1745, %v1741
        %v1978 = vpack.c.b16 %v1750, %v1746
        %v1979 = vpack.c.b16 %v1751, %v1747
        %v1980 = vpack.c.b16 %v1752, %v1748
        %v1981 = vpack.c.b16 %v1753, %v1749
        %v1982 = vpack.c.b16 %v1758, %v1754
        %v1983 = vpack.c.b16 %v1759, %v1755
        %v1984 = vpack.c.b16 %v1760, %v1756
        %v1985 = vpack.c.b16 %v1761, %v1757
        %v1986 = vpack.c.b16 %v1766, %v1762
        %v1987 = vpack.c.b16 %v1767, %v1763
        %v1988 = vpack.c.b16 %v1768, %v1764
        %v1989 = vpack.c.b16 %v1769, %v1765
        %v1990 = vpack.c.b16 %v1774, %v1770
        %v1991 = vpack.c.b16 %v1775, %v1771
        %v1992 = vpack.c.b16 %v1776, %v1772
        %v1993 = vpack.c.b16 %v1777, %v1773
        %v1994 = vpack.c.b16 %v1782, %v1778
        %v1995 = vpack.c.b16 %v1783, %v1779
        %v1996 = vpack.c.b16 %v1784, %v1780
        %v1997 = vpack.c.b16 %v1785, %v1781
        %v1998 = vpack.c.b16 %v1790, %v1786
        %v1999 = vpack.c.b16 %v1791, %v1787
        %v2000 = vpack.c.b16 %v1792, %v1788
        %v2001 = vpack.c.b16 %v1793, %v1789
        %v2002 = vpack.c.b16 %v1798, %v1794
        %v2003 = vpack.c.b16 %v1799, %v1795
        %v2004 = vpack.c.b16 %v1800, %v1796
        %v2005 = vpack.c.b16 %v1801, %v1797
        %v2006 = vpack.c.b16 %v1806, %v1802
        %v2007 = vpack.c.b16 %v1807, %v1803
        %v2008 = vpack.c.b16 %v1808, %v1804
        %v2009 = vpack.c.b16 %v1809, %v1805
        %v2010 = vpack.c.b16 %v1814, %v1810
        %v2011 = vpack.c.b16 %v1815, %v1811
        %v2012 = vpack.c.b16 %v1816, %v1812
        %v2013 = vpack.c.b16 %v1817, %v1813
        %v2014 = vpack.c.b16 %v1822, %v1818
        %v2015 = vpack.c.b16 %v1823, %v1819
        %v2016 = vpack.c.b16 %v1824, %v1820
        %v2017 = vpack.c.b16 %v1825, %v1821
        %v2018 = vpack.c.b16 %v1830, %v1826
        %v2019 = vpack.c.b16 %v1831, %v1827
        %v2020 = vpack.c.b16 %v1832, %v1828
        %v2021 = vpack.c.b16 %v1833, %v1829
        %v2022 = vpack.c.b16 %v1838, %v1834
        %v2023 = vpack.c.b16 %v1839, %v1835
        %v2024 = vpack.c.b16 %v1840, %v1836
        %v2025 = vpack.c.b16 %v1841, %v1837
        %v2026 = vpack.c.b16 %v1846, %v1842
        %v2027 = vpack.c.b16 %v1847, %v1843
        %v2028 = vpack.c.b16 %v1848, %v1844
        %v2029 = vpack.c.b16 %v1849, %v1845
        %v2030 = vpack.c.b16 %v1854, %v1850
        %v2031 = vpack.c.b16 %v1855, %v1851
        %v2032 = vpack.c.b16 %v1856, %v1852
        %v2033 = vpack.c.b16 %v1857, %v1853
        %v2034 = vpack.c.b16 %v1862, %v1858
        %v2035 = vpack.c.b16 %v1863, %v1859
        %v2036 = vpack.c.b16 %v1864, %v1860
        %v2037 = vpack.c.b16 %v1865, %v1861
        %v2038 = vpack.c.b16 %v1870, %v1866
        %v2039 = vpack.c.b16 %v1871, %v1867
        %v2040 = vpack.c.b16 %v1872, %v1868
        %v2041 = vpack.c.b16 %v1873, %v1869
        %v2042 = vpack.c.b16 %v1878, %v1874
        %v2043 = vpack.c.b16 %v1879, %v1875
        %v2044 = vpack.c.b16 %v1880, %v1876
        %v2045 = vpack.c.b16 %v1881, %v1877
        %v2046 = vpack.c.b16 %v1886, %v1882
        %v2047 = vpack.c.b16 %v1887, %v1883
        %v2048 = vpack.c.b16 %v1888, %v1884
        %v2049 = vpack.c.b16 %v1889, %v1885
        %v2050 = vpack.c.b16 %v1894, %v1890
        %v2051 = vpack.c.b16 %v1895, %v1891
        %v2052 = vpack.c.b16 %v1896, %v1892
        %v2053 = vpack.c.b16 %v1897, %v1893
        %v2054 = vpack.c.b16 %v1902, %v1898
        %v2055 = vpack.c.b16 %v1903, %v1899
        %v2056 = vpack.c.b16 %v1904, %v1900
        %v2057 = vpack.c.b16 %v1905, %v1901
        %v2058 = vpack.c.b16 %v1910, %v1906
        %v2059 = vpack.c.b16 %v1911, %v1907
        %v2060 = vpack.c.b16 %v1912, %v1908
        %v2061 = vpack.c.b16 %v1913, %v1909
        %v2062 = vpack.c.b16 %v1918, %v1914
        %v2063 = vpack.c.b16 %v1919, %v1915
        %v2064 = vpack.c.b16 %v1920, %v1916
        %v2065 = vpack.c.b16 %v1921, %v1917
        %v2066 = vpack.c.b16 %v1926, %v1922
        %v2067 = vpack.c.b16 %v1927, %v1923
        %v2068 = vpack.c.b16 %v1928, %v1924
        %v2069 = vpack.c.b16 %v1929, %v1925
        %v2070 = vpack.c.b16 %v1934, %v1930
        %v2071 = vpack.c.b16 %v1935, %v1931
        %v2072 = vpack.c.b16 %v1936, %v1932
        %v2073 = vpack.c.b16 %v1937, %v1933
        %v2074 = vpack.c.b16 %v1942, %v1938
        %v2075 = vpack.c.b16 %v1943, %v1939
        %v2076 = vpack.c.b16 %v1944, %v1940
        %v2077 = vpack.c.b16 %v1945, %v1941
        %v2078 = vpack.c.b16 %v1950, %v1946
        %v2079 = vpack.c.b16 %v1951, %v1947
        %v2080 = vpack.c.b16 %v1952, %v1948
        %v2081 = vpack.c.b16 %v1953, %v1949
        %2210 = vmatpush.bf16.msra.mxu0 %v1982
        %2211 = vmatpush.bf16.msra.mxu0 %v1978
        %2212 = vmatpush.bf16.msra.mxu0 %v1974
        %2213 = vmatpush.bf16.msra.mxu0 %v1970
        %2214 = vmatpush.bf16.msra.mxu0 %v1966
        %2215 = vmatpush.bf16.msra.mxu0 %v1962
        %2216 = vmatpush.bf16.msra.mxu0 %v1958
        %2217 = vmatpush.bf16.msra.mxu0 %v1954
        %2218 = vmatmul.bf16.gmra.mxu0 %v1438
        %v2219 = vpop.f32.mrf.mxu0
        %v2220 = vadd.f32 0.0, %v2219
        %v2221 = vpop.f32.mrf.mxu0
        %v2222 = vadd.f32 0.0, %v2221
        %2223 = vdwg.mxu0
        %2224 = vmatpush.bf16.msra.mxu0 %v2014
        %2225 = vmatpush.bf16.msra.mxu0 %v2010
        %2226 = vmatpush.bf16.msra.mxu0 %v2006
        %2227 = vmatpush.bf16.msra.mxu0 %v2002
        %2228 = vmatpush.bf16.msra.mxu0 %v1998
        %2229 = vmatpush.bf16.msra.mxu0 %v1994
        %2230 = vmatpush.bf16.msra.mxu0 %v1990
        %2231 = vmatpush.bf16.msra.mxu0 %v1986
        %2232 = vmatmul.bf16.gmra.mxu0 %v1439
        %v2233 = vpop.f32.mrf.mxu0
        %v2234 = vadd.f32 %v2220, %v2233
        %v2235 = vpop.f32.mrf.mxu0
        %v2236 = vadd.f32 %v2222, %v2235
        %2237 = vdwg.mxu0
        %2238 = vmatpush.bf16.msra.mxu0 %v2046
        %2239 = vmatpush.bf16.msra.mxu0 %v2042
        %2240 = vmatpush.bf16.msra.mxu0 %v2038
        %2241 = vmatpush.bf16.msra.mxu0 %v2034
        %2242 = vmatpush.bf16.msra.mxu0 %v2030
        %2243 = vmatpush.bf16.msra.mxu0 %v2026
        %2244 = vmatpush.bf16.msra.mxu0 %v2022
        %2245 = vmatpush.bf16.msra.mxu0 %v2018
        %2246 = vmatmul.bf16.gmra.mxu0 %v1440
        %v2247 = vpop.f32.mrf.mxu0
        %v2248 = vadd.f32 %v2234, %v2247
        %v2249 = vpop.f32.mrf.mxu0
        %v2250 = vadd.f32 %v2236, %v2249
        %2251 = vdwg.mxu0
        %2252 = vmatpush.bf16.msra.mxu0 %v2078
        %2253 = vmatpush.bf16.msra.mxu0 %v2074
        %2254 = vmatpush.bf16.msra.mxu0 %v2070
        %2255 = vmatpush.bf16.msra.mxu0 %v2066
        %2256 = vmatpush.bf16.msra.mxu0 %v2062
        %2257 = vmatpush.bf16.msra.mxu0 %v2058
        %2258 = vmatpush.bf16.msra.mxu0 %v2054
        %2259 = vmatpush.bf16.msra.mxu0 %v2050
        %2260 = vmatmul.bf16.gmra.mxu0 %v1441
        %v2261 = vpop.f32.mrf.mxu0
        %v2262 = vadd.f32 %v2248, %v2261
        %v2263 = vpop.f32.mrf.mxu0
        %v2264 = vadd.f32 %v2250, %v2263
        %2265 = vdwg.mxu0
        %2266 = vmatpush.bf16.msra.mxu0 %v1983
        %2267 = vmatpush.bf16.msra.mxu0 %v1979
        %2268 = vmatpush.bf16.msra.mxu0 %v1975
        %2269 = vmatpush.bf16.msra.mxu0 %v1971
        %2270 = vmatpush.bf16.msra.mxu0 %v1967
        %2271 = vmatpush.bf16.msra.mxu0 %v1963
        %2272 = vmatpush.bf16.msra.mxu0 %v1959
        %2273 = vmatpush.bf16.msra.mxu0 %v1955
        %2274 = vmatmul.bf16.gmra.mxu0 %v1438
        %v2275 = vpop.f32.mrf.mxu0
        %v2276 = vadd.f32 0.0, %v2275
        %v2277 = vpop.f32.mrf.mxu0
        %v2278 = vadd.f32 0.0, %v2277
        %2279 = vdwg.mxu0
        %2280 = vmatpush.bf16.msra.mxu0 %v2015
        %2281 = vmatpush.bf16.msra.mxu0 %v2011
        %2282 = vmatpush.bf16.msra.mxu0 %v2007
        %2283 = vmatpush.bf16.msra.mxu0 %v2003
        %2284 = vmatpush.bf16.msra.mxu0 %v1999
        %2285 = vmatpush.bf16.msra.mxu0 %v1995
        %2286 = vmatpush.bf16.msra.mxu0 %v1991
        %2287 = vmatpush.bf16.msra.mxu0 %v1987
        %2288 = vmatmul.bf16.gmra.mxu0 %v1439
        %v2289 = vpop.f32.mrf.mxu0
        %v2290 = vadd.f32 %v2276, %v2289
        %v2291 = vpop.f32.mrf.mxu0
        %v2292 = vadd.f32 %v2278, %v2291
        %2293 = vdwg.mxu0
        %2294 = vmatpush.bf16.msra.mxu0 %v2047
        %2295 = vmatpush.bf16.msra.mxu0 %v2043
        %2296 = vmatpush.bf16.msra.mxu0 %v2039
        %2297 = vmatpush.bf16.msra.mxu0 %v2035
        %2298 = vmatpush.bf16.msra.mxu0 %v2031
        %2299 = vmatpush.bf16.msra.mxu0 %v2027
        %2300 = vmatpush.bf16.msra.mxu0 %v2023
        %2301 = vmatpush.bf16.msra.mxu0 %v2019
        %2302 = vmatmul.bf16.gmra.mxu0 %v1440
        %v2303 = vpop.f32.mrf.mxu0
        %v2304 = vadd.f32 %v2290, %v2303
        %v2305 = vpop.f32.mrf.mxu0
        %v2306 = vadd.f32 %v2292, %v2305
        %2307 = vdwg.mxu0
        %2308 = vmatpush.bf16.msra.mxu0 %v2079
        %2309 = vmatpush.bf16.msra.mxu0 %v2075
        %2310 = vmatpush.bf16.msra.mxu0 %v2071
        %2311 = vmatpush.bf16.msra.mxu0 %v2067
        %2312 = vmatpush.bf16.msra.mxu0 %v2063
        %2313 = vmatpush.bf16.msra.mxu0 %v2059
        %2314 = vmatpush.bf16.msra.mxu0 %v2055
        %2315 = vmatpush.bf16.msra.mxu0 %v2051
        %2316 = vmatmul.bf16.gmra.mxu0 %v1441
        %v2317 = vpop.f32.mrf.mxu0
        %v2318 = vadd.f32 %v2304, %v2317
        %v2319 = vpop.f32.mrf.mxu0
        %v2320 = vadd.f32 %v2306, %v2319
        %2321 = vdwg.mxu0
        %2322 = vmatpush.bf16.msra.mxu0 %v1984
        %2323 = vmatpush.bf16.msra.mxu0 %v1980
        %2324 = vmatpush.bf16.msra.mxu0 %v1976
        %2325 = vmatpush.bf16.msra.mxu0 %v1972
        %2326 = vmatpush.bf16.msra.mxu0 %v1968
        %2327 = vmatpush.bf16.msra.mxu0 %v1964
        %2328 = vmatpush.bf16.msra.mxu0 %v1960
        %2329 = vmatpush.bf16.msra.mxu0 %v1956
        %2330 = vmatmul.bf16.gmra.mxu0 %v1438
        %v2331 = vpop.f32.mrf.mxu0
        %v2332 = vadd.f32 0.0, %v2331
        %v2333 = vpop.f32.mrf.mxu0
        %v2334 = vadd.f32 0.0, %v2333
        %2335 = vdwg.mxu0
        %2336 = vmatpush.bf16.msra.mxu0 %v2016
        %2337 = vmatpush.bf16.msra.mxu0 %v2012
        %2338 = vmatpush.bf16.msra.mxu0 %v2008
        %2339 = vmatpush.bf16.msra.mxu0 %v2004
        %2340 = vmatpush.bf16.msra.mxu0 %v2000
        %2341 = vmatpush.bf16.msra.mxu0 %v1996
        %2342 = vmatpush.bf16.msra.mxu0 %v1992
        %2343 = vmatpush.bf16.msra.mxu0 %v1988
        %2344 = vmatmul.bf16.gmra.mxu0 %v1439
        %v2345 = vpop.f32.mrf.mxu0
        %v2346 = vadd.f32 %v2332, %v2345
        %v2347 = vpop.f32.mrf.mxu0
        %v2348 = vadd.f32 %v2334, %v2347
        %2349 = vdwg.mxu0
        %2350 = vmatpush.bf16.msra.mxu0 %v2048
        %2351 = vmatpush.bf16.msra.mxu0 %v2044
        %2352 = vmatpush.bf16.msra.mxu0 %v2040
        %2353 = vmatpush.bf16.msra.mxu0 %v2036
        %2354 = vmatpush.bf16.msra.mxu0 %v2032
        %2355 = vmatpush.bf16.msra.mxu0 %v2028
        %2356 = vmatpush.bf16.msra.mxu0 %v2024
        %2357 = vmatpush.bf16.msra.mxu0 %v2020
        %2358 = vmatmul.bf16.gmra.mxu0 %v1440
        %v2359 = vpop.f32.mrf.mxu0
        %v2360 = vadd.f32 %v2346, %v2359
        %v2361 = vpop.f32.mrf.mxu0
        %v2362 = vadd.f32 %v2348, %v2361
        %2363 = vdwg.mxu0
        %2364 = vmatpush.bf16.msra.mxu0 %v2080
        %2365 = vmatpush.bf16.msra.mxu0 %v2076
        %2366 = vmatpush.bf16.msra.mxu0 %v2072
        %2367 = vmatpush.bf16.msra.mxu0 %v2068
        %2368 = vmatpush.bf16.msra.mxu0 %v2064
        %2369 = vmatpush.bf16.msra.mxu0 %v2060
        %2370 = vmatpush.bf16.msra.mxu0 %v2056
        %2371 = vmatpush.bf16.msra.mxu0 %v2052
        %2372 = vmatmul.bf16.gmra.mxu0 %v1441
        %v2373 = vpop.f32.mrf.mxu0
        %v2374 = vadd.f32 %v2360, %v2373
        %v2375 = vpop.f32.mrf.mxu0
        %v2376 = vadd.f32 %v2362, %v2375
        %2377 = vdwg.mxu0
        %2378 = vmatpush.bf16.msra.mxu0 %v1985
        %2379 = vmatpush.bf16.msra.mxu0 %v1981
        %2380 = vmatpush.bf16.msra.mxu0 %v1977
        %2381 = vmatpush.bf16.msra.mxu0 %v1973
        %2382 = vmatpush.bf16.msra.mxu0 %v1969
        %2383 = vmatpush.bf16.msra.mxu0 %v1965
        %2384 = vmatpush.bf16.msra.mxu0 %v1961
        %2385 = vmatpush.bf16.msra.mxu0 %v1957
        %2386 = vmatmul.bf16.gmra.mxu0 %v1438
        %v2387 = vpop.f32.mrf.mxu0
        %v2388 = vadd.f32 0.0, %v2387
        %v2389 = vpop.f32.mrf.mxu0
        %v2390 = vadd.f32 0.0, %v2389
        %2391 = vdwg.mxu0
        %2392 = vmatpush.bf16.msra.mxu0 %v2017
        %2393 = vmatpush.bf16.msra.mxu0 %v2013
        %2394 = vmatpush.bf16.msra.mxu0 %v2009
        %2395 = vmatpush.bf16.msra.mxu0 %v2005
        %2396 = vmatpush.bf16.msra.mxu0 %v2001
        %2397 = vmatpush.bf16.msra.mxu0 %v1997
        %2398 = vmatpush.bf16.msra.mxu0 %v1993
        %2399 = vmatpush.bf16.msra.mxu0 %v1989
        %2400 = vmatmul.bf16.gmra.mxu0 %v1439
        %v2401 = vpop.f32.mrf.mxu0
        %v2402 = vadd.f32 %v2388, %v2401
        %v2403 = vpop.f32.mrf.mxu0
        %v2404 = vadd.f32 %v2390, %v2403
        %2405 = vdwg.mxu0
        %2406 = vmatpush.bf16.msra.mxu0 %v2049
        %2407 = vmatpush.bf16.msra.mxu0 %v2045
        %2408 = vmatpush.bf16.msra.mxu0 %v2041
        %2409 = vmatpush.bf16.msra.mxu0 %v2037
        %2410 = vmatpush.bf16.msra.mxu0 %v2033
        %2411 = vmatpush.bf16.msra.mxu0 %v2029
        %2412 = vmatpush.bf16.msra.mxu0 %v2025
        %2413 = vmatpush.bf16.msra.mxu0 %v2021
        %2414 = vmatmul.bf16.gmra.mxu0 %v1440
        %v2415 = vpop.f32.mrf.mxu0
        %v2416 = vadd.f32 %v2402, %v2415
        %v2417 = vpop.f32.mrf.mxu0
        %v2418 = vadd.f32 %v2404, %v2417
        %2419 = vdwg.mxu0
        %2420 = vmatpush.bf16.msra.mxu0 %v2081
        %2421 = vmatpush.bf16.msra.mxu0 %v2077
        %2422 = vmatpush.bf16.msra.mxu0 %v2073
        %2423 = vmatpush.bf16.msra.mxu0 %v2069
        %2424 = vmatpush.bf16.msra.mxu0 %v2065
        %2425 = vmatpush.bf16.msra.mxu0 %v2061
        %2426 = vmatpush.bf16.msra.mxu0 %v2057
        %2427 = vmatpush.bf16.msra.mxu0 %v2053
        %2428 = vmatmul.bf16.gmra.mxu0 %v1441
        %v2429 = vpop.f32.mrf.mxu0
        %v2430 = vadd.f32 %v2416, %v2429
        %v2431 = vpop.f32.mrf.mxu0
        %v2432 = vadd.f32 %v2418, %v2431
        %2433 = vdwg.mxu0
        %v2434 = vadd.f32 %v1430, %v2262
        %v2435 = vadd.f32 %v1431, %v2318
        %v2436 = vadd.f32 %v1432, %v2374
        %v2437 = vadd.f32 %v1433, %v2430
        %v2438 = vadd.f32 %v1434, %v2264
        %v2439 = vadd.f32 %v1435, %v2320
        %v2440 = vadd.f32 %v1436, %v2376
        %v2441 = vadd.f32 %v1437, %v2432
        %2442 = vst [vmem:[#allocation2] sm:$0xff] %v2434
        %2443 = vst [vmem:[#allocation2 + $0x8] sm:$0xff] %v2435
        %2444 = vst [vmem:[#allocation2 + $0x10] sm:$0xff] %v2436
        %2445 = vst [vmem:[#allocation2 + $0x18] sm:$0xff] %v2437
        %2446 = vst [vmem:[#allocation2 + $0x20] sm:$0xff] %v2438
        %2447 = vst [vmem:[#allocation2 + $0x28] sm:$0xff] %v2439
        %2448 = vst [vmem:[#allocation2 + $0x30] sm:$0xff] %v2440
        %2449 = vst [vmem:[#allocation2 + $0x38] sm:$0xff] %v2441
        %p2450 = scmp.eq.s32.totalorder %s29, 3
        // Predicated region
        $region65: #{tpu_custom_call.1} parent=39 // pred_check
          %p2451 = pneg %p2450
        $region66: #{tpu_custom_call.1} parent=39 // pred_check_branch
          %2453 = sbr.rel (%p2451) target = $region68
        $region67: #{tpu_custom_call.1} parent=39 // pred_region
          %v2454 = vld [vmem:[#allocation2] sm:$0xff]
          %v2455 = vld [vmem:[#allocation2 + $0x8] sm:$0xff]
          %v2456 = vld [vmem:[#allocation2 + $0x10] sm:$0xff]
          %v2457 = vld [vmem:[#allocation2 + $0x18] sm:$0xff]
          %v2458 = vld [vmem:[#allocation2 + $0x20] sm:$0xff]
          %v2459 = vld [vmem:[#allocation2 + $0x28] sm:$0xff]
          %v2460 = vld [vmem:[#allocation2 + $0x30] sm:$0xff]
          %v2461 = vld [vmem:[#allocation2 + $0x38] sm:$0xff]
          %2462 = vst [vmem:[#allocation12] sm:$0xff] %v2454
          %2463 = vst [vmem:[#allocation12 + $0x8] sm:$0xff] %v2455
          %2464 = vst [vmem:[#allocation12 + $0x10] sm:$0xff] %v2456
          %2465 = vst [vmem:[#allocation12 + $0x18] sm:$0xff] %v2457
          %2466 = vst [vmem:[#allocation12 + $0x20] sm:$0xff] %v2458
          %2467 = vst [vmem:[#allocation12 + $0x28] sm:$0xff] %v2459
          %2468 = vst [vmem:[#allocation12 + $0x30] sm:$0xff] %v2460
          %2469 = vst [vmem:[#allocation12 + $0x38] sm:$0xff] %v2461
        $region68: #{tpu_custom_call.1} parent=39 // pred_fallthru
          _
        // Predicated region
        $region69: #{tpu_custom_call.1} parent=39 // pred_check
          %p2470 = pneg %p179
        $region70: #{tpu_custom_call.1} parent=39 // pred_check_branch
          %2472 = sbr.rel (%p2470) target = $region72
        $region71: #{tpu_custom_call.1} parent=39 // pred_region
          %s2473 = smul.u32 2, %s28
          %2475 = vsyncadd [#allocation5], 0
          %s2476 = smul.addr %s2473, 4
          %s2477 = smul.addr %s2476, 8
          %s2478 = scalar_lea.hbm %s5, %s2477
          %s2479 = sshll.u32 [#allocation12], 4
          %s2480 = int_to_ptr.vmem [resolvable:$true] %s2479
          %s2481 = sshll.u32 %s2478, 4
          %s2482 = int_to_ptr.hbm [resolvable:$true] %s2481
          %2487 = dma.vmem_to_hbm [thread:$0]  %s2480, 1024, %s2482, [#allocation5], 512, 512, 32
        $region72: #{tpu_custom_call.1} parent=39 // pred_fallthru
          _
        // Predicated region
        $region73: #{tpu_custom_call.1} parent=39 // pred_check
          %p2488 = pneg %p179
        $region74: #{tpu_custom_call.1} parent=39 // pred_check_branch
          %2490 = sbr.rel (%p2488) target = $region76
        $region75: #{tpu_custom_call.1} parent=39 // pred_region
          %2492 = dma.done [#allocation5], 1024
        $region76: #{tpu_custom_call.1} parent=39 // pred_fallthru
          _
      $region40: #{tpu_custom_call.1} parent=5 // pred_fallthru
        _
      %p2493 = scmp.le.s32.totalorder 2, %s19
      // Predicated region
      $region77: #{tpu_custom_call.1} parent=5 // pred_check
        %p2494 = pneg %p2493
      $region78: #{tpu_custom_call.1} parent=5 // pred_check_branch
        %2496 = sbr.rel (%p2494) target = $region80
      $region79: #{tpu_custom_call.1} parent=5 // pred_region
        %s2497 = ssub.s32 %s19, 2
      $region80: #{tpu_custom_call.1} parent=5 // pred_fallthru
        _
    $region6: #{tpu_custom_call.1} parent=1 // loop_footer
      %s23 = sadd.s32 1, %s19
    $region7: #{tpu_custom_call.1} parent=1 // loop_footer_branch
      %18 = sbr.rel target = $region3
    $region8: #{tpu_custom_call.1} parent=1 // loop_exit
      _
    %2498 = vsyncpa [#allocation4], 1
    %s2499 = scalar_lea.sflag [#allocation4], 1
    %2500 = vsyncpa %s2499, 1
    %2501 = vsyncpa [#allocation7], 1
    %s2502 = scalar_lea.sflag [#allocation7], 1
    %2503 = vsyncpa %s2502, 1
    %2504 = vsyncpa [#allocation10], 1
    %s2505 = scalar_lea.sflag [#allocation10], 1
    %2506 = vsyncpa %s2505, 1
    %2507 = vsyncpa [#allocation5], 1
    %s2508 = scalar_lea.sflag [#allocation5], 1
    %2509 = vsyncpa %s2508, 1

</llo_original>
